<compile_context>
chip_gen: v6e
topology: v6e:2x2x1
jax: 0.10.0
libtpu: 0.0.40
codegen_flags: <defaults>
</compile_context>

<pallas_src>
import math
from functools import partial

import jax
import jax.numpy as jnp
from jax import lax
from jax.experimental import pallas as pl
from jax.experimental.pallas import tpu as pltpu

_BN_EPS = 1e-5
# Faithful to the PyTorch module (float32).  Set to jnp.bfloat16 for a
# mixed-precision fast path (bf16 MXU operands, f32 accumulation).
_MXU_DTYPE = jnp.float32


def _round_up(x, m):
    return (x + m - 1) // m * m


def _choose_tile(m, cap=512):
    """Pick an M tile <= cap that is a multiple of 8 and minimizes padding."""
    n = -(-m // cap)
    t = _round_up(-(-m // n), 8)
    return t, t * n


def _choose_tn(cout):
    if cout <= 128:
        return cout
    if cout <= 256:
        return 128
    return 256


# ---------------------------------------------------------------------------
# Kernel A: K-tiled fused matmul  (im2col / 1x1 convs):  relu?(x @ w + shift)
# ---------------------------------------------------------------------------
def _mm_kernel(x_ref, w_ref, sh_ref, o_ref, acc_ref, *, relu):
    k = pl.program_id(2)

    @pl.when(k == 0)
    def _():
        acc_ref[...] = jnp.zeros_like(acc_ref)

    acc_ref[...] += jnp.dot(x_ref[...], w_ref[...],
                            preferred_element_type=jnp.float32)

    @pl.when(k == pl.num_programs(2) - 1)
    def _():
        y = acc_ref[...] + sh_ref[...]
        if relu:
            y = jnp.maximum(y, 0.0)
        o_ref[...] = y.astype(o_ref.dtype)


def fused_matmul(x_in, w_in, shift_f32, relu):
    """y = relu?(x @ w + shift).  x:(M,K), w:(K,N)  (BN pre-folded into w)."""
    M, K = x_in.shape
    _, N = w_in.shape

    if K <= 1152:
        TK, Kp = K, K
    else:
        TK = 1152
        Kp = _round_up(K, TK)
    TM, Mp = _choose_tile(M)
    TN = _choose_tn(N)
    assert N % TN == 0

    xp = x_in if (Mp == M and Kp == K) else jnp.pad(
        x_in, ((0, Mp - M), (0, Kp - K)))
    wp = w_in if Kp == K else jnp.pad(w_in, ((0, Kp - K), (0, 0)))
    sh = shift_f32.reshape(1, N)

    out = pl.pallas_call(
        partial(_mm_kernel, relu=relu),
        out_shape=jax.ShapeDtypeStruct((Mp, N), jnp.float32),
        grid=(Mp // TM, N // TN, Kp // TK),
        in_specs=[
            pl.BlockSpec((TM, TK), lambda i, j, k: (i, k)),
            pl.BlockSpec((TK, TN), lambda i, j, k: (k, j)),
            pl.BlockSpec((1, TN), lambda i, j, k: (0, j)),
        ],
        out_specs=pl.BlockSpec((TM, TN), lambda i, j, k: (i, j)),
        scratch_shapes=[pltpu.VMEM((TM, TN), jnp.float32)],
        compiler_params=pltpu.CompilerParams(
            dimension_semantics=("parallel", "parallel", "arbitrary")),
    )(xp, wp, sh)
    return out if Mp == M else out[:M]


# ---------------------------------------------------------------------------
# Kernel B: stride-1 3x3 conv as a 9-tap accumulation (no im2col in HBM)
# ---------------------------------------------------------------------------
def _tap_kernel(*refs, wp_cols, tm, relu, has_res):
    if has_res:
        x_ref, w_ref, sh_ref, res_ref, o_ref, acc_ref = refs
    else:
        x_ref, w_ref, sh_ref, o_ref, acc_ref = refs
        res_ref = None

    i = pl.program_id(0)
    t = pl.program_id(2)

    @pl.when(t == 0)
    def _():
        acc_ref[...] = jnp.zeros_like(acc_ref)

    di = t // 3
    dj = t - di * 3
    start = i * tm + di * wp_cols + dj
    lhs = x_ref[pl.ds(start, tm), :].astype(_MXU_DTYPE)
    acc_ref[...] += jnp.dot(lhs, w_ref[0], preferred_element_type=jnp.float32)

    @pl.when(t == 8)
    def _():
        y = acc_ref[...] + sh_ref[...]
        if has_res:
            y = y + res_ref[...]
        if relu:
            y = jnp.maximum(y, 0.0)
        o_ref[...] = y.astype(o_ref.dtype)


def conv3x3_s1(x_nhwc, prep, relu=True, residual_nhwc=None):
    N, H, W, cin = x_nhwc.shape
    cout = prep["cout"]
    Hp, Wp = H + 2, W + 2
    M = N * Hp * Wp
    TM, Mp = _choose_tile(M)
    TN = _choose_tn(cout)
    P = _round_up(Mp + 2 * Wp + 2, 8)   # guard rows for the largest tap offset

    xpad = jnp.pad(x_nhwc, ((0, 0), (1, 1), (1, 1), (0, 0)))
    xflat = jnp.pad(xpad.reshape(M, cin), ((0, P - M), (0, 0)))
    sh = prep["shift"].reshape(1, cout)

    args = [xflat, prep["wtap"], sh]
    in_specs = [
        pl.BlockSpec((P, cin), lambda i, j, t: (0, 0)),        # resident in VMEM
        pl.BlockSpec((1, cin, TN), lambda i, j, t: (t, 0, j)),  # one tap's weight
        pl.BlockSpec((1, TN), lambda i, j, t: (0, j)),
    ]
    has_res = residual_nhwc is not None
    if has_res:
        rflat = jnp.pad(residual_nhwc,
                        ((0, 0), (0, 2), (0, 2), (0, 0))).reshape(M, cout)
        if Mp != M:
            rflat = jnp.pad(rflat, ((0, Mp - M), (0, 0)))
        args.append(rflat)
        in_specs.append(pl.BlockSpec((TM, TN), lambda i, j, t: (i, j)))

    out = pl.pallas_call(
        partial(_tap_kernel, wp_cols=Wp, tm=TM, relu=relu, has_res=has_res),
        out_shape=jax.ShapeDtypeStruct((Mp, cout), jnp.float32),
        grid=(Mp // TM, cout // TN, 9),
        in_specs=in_specs,
        out_specs=pl.BlockSpec((TM, TN), lambda i, j, t: (i, j)),
        scratch_shapes=[pltpu.VMEM((TM, TN), jnp.float32)],
        compiler_params=pltpu.CompilerParams(
            dimension_semantics=("parallel", "parallel", "arbitrary")),
    )(*args)

    y = out if Mp == M else out[:M]
    return y.reshape(N, Hp, Wp, cout)[:, :H, :W, :]


# ---------------------------------------------------------------------------
# MaxPool 3x3 / stride 2 / pad 1 via 4 even/odd spatial phases (no 9x buffer)
# ---------------------------------------------------------------------------
def _maxpool_kernel(a_ref, b_ref, c_ref, d_ref, o_ref):
    oh, ow = o_ref.shape[1], o_ref.shape[2]
    a = a_ref[0]
    b = b_ref[0]
    c = c_ref[0]
    d = d_ref[0]
    m = a[:oh, :ow]
    m = jnp.maximum(m, a[:oh, 1:])
    m = jnp.maximum(m, a[1:, :ow])
    m = jnp.maximum(m, a[1:, 1:])
    m = jnp.maximum(m, b[:oh, :ow])
    m = jnp.maximum(m, b[1:, :ow])
    m = jnp.maximum(m, c[:oh, :ow])
    m = jnp.maximum(m, c[:oh, 1:])
    m = jnp.maximum(m, d[:oh, :ow])
    o_ref[0] = m


def maxpool2d_3x3_s2(x_nhwc):
    N, H, W, C = x_nhwc.shape
    OH = (H - 1) // 2 + 1
    OW = (W - 1) // 2 + 1
    ph = 2 * OH + 2 - H - 1
    pw = 2 * OW + 2 - W - 1
    xp = jnp.pad(x_nhwc, ((0, 0), (1, ph), (1, pw), (0, 0)),
                 constant_values=float("-inf"))
    r = xp.reshape(N, OH + 1, 2, OW + 1, 2, C)
    A = r[:, :, 0, :, 0, :]
    B = r[:, :, 0, :, 1, :]
    Cc = r[:, :, 1, :, 0, :]
    D = r[:, :, 1, :, 1, :]
    spec_in = pl.BlockSpec((1, OH + 1, OW + 1, C), lambda n: (n, 0, 0, 0))
    return pl.pallas_call(
        _maxpool_kernel,
        out_shape=jax.ShapeDtypeStruct((N, OH, OW, C), x_nhwc.dtype),
        grid=(N,),
        in_specs=[spec_in] * 4,
        out_specs=pl.BlockSpec((1, OH, OW, C), lambda n: (n, 0, 0, 0)),
        compiler_params=pltpu.CompilerParams(dimension_semantics=("parallel",)),
    )(A, B, Cc, D)


# ---------------------------------------------------------------------------
# im2col (only used for the stem and the three stride-2 3x3 convs)
# ---------------------------------------------------------------------------
def _im2col(x_nhwc, k, stride, pad):
    N, H, W, C = x_nhwc.shape
    OH = (H + 2 * pad - k) // stride + 1
    OW = (W + 2 * pad - k) // stride + 1
    xp = jnp.pad(x_nhwc, ((0, 0), (pad, pad), (pad, pad), (0, 0)))
    cols = []
    for di in range(k):
        for dj in range(k):
            cols.append(
                xp[:, di:di + stride * OH:stride, dj:dj + stride * OW:stride, :])
    patches = jnp.concatenate(cols, axis=-1)
    return patches.reshape(N * OH * OW, k * k * C), N, OH, OW


def conv_generic(x_nhwc, prep, relu):
    k, stride, pad, cout = prep["k"], prep["stride"], prep["pad"], prep["cout"]
    if k == 1:
        xs = x_nhwc[:, ::stride, ::stride, :]
        N, OH, OW, cin = xs.shape
        lhs = xs.reshape(N * OH * OW, cin).astype(_MXU_DTYPE)
    else:
        lhs, N, OH, OW = _im2col(x_nhwc.astype(_MXU_DTYPE), k, stride, pad)
    out = fused_matmul(lhs, prep["w2d"], prep["shift"], relu)
    return out.reshape(N, OH, OW, cout)


# ---------------------------------------------------------------------------
# One-time parameter preparation (BN fold + transpose + MXU-dtype cast,
# hoisted out of the forward pass)
# ---------------------------------------------------------------------------
def _fold_bn(bn):
    scale = bn["gamma"] / jnp.sqrt(bn["var"] + _BN_EPS)
    shift = bn["beta"] - bn["mean"] * scale
    return scale, shift


def _prep_generic(w_oihw, bn, stride, pad):
    cout, cin, kh, kw = w_oihw.shape
    scale, shift = _fold_bn(bn)
    w2d = jnp.transpose(w_oihw, (2, 3, 1, 0)).reshape(kh * kw * cin, cout)
    w2d = (w2d * scale[None, :]).astype(_MXU_DTYPE)
    return dict(kind="generic", w2d=w2d, shift=shift, k=kh, stride=stride,
                pad=pad, cout=cout)


def _prep_tap(w_oihw, bn):
    cout, cin, kh, kw = w_oihw.shape
    scale, shift = _fold_bn(bn)
    wtap = jnp.transpose(w_oihw, (2, 3, 1, 0)).reshape(kh * kw, cin, cout)
    wtap = (wtap * scale[None, None, :]).astype(_MXU_DTYPE)
    return dict(kind="tap", wtap=wtap, shift=shift, cout=cout)


def prepare_params(params):
    prep = dict(stem=_prep_generic(params["conv1_w"], params["bn1"], 2, 3))
    for lname in ("layer1", "layer2", "layer3", "layer4"):
        blocks = []
        for bp in params[lname]:
            s = bp["stride"]
            blocks.append(dict(
                conv1=(_prep_tap(bp["conv1_w"], bp["bn1"]) if s == 1
                       else _prep_generic(bp["conv1_w"], bp["bn1"], s, 1)),
                conv2=_prep_tap(bp["conv2_w"], bp["bn2"]),
                downsample=(None if bp["downsample"] is None else
                            _prep_generic(bp["downsample"]["w"],
                                          bp["downsample"]["bn"], s, 0)),
            ))
        prep[lname] = blocks
    return prep


# ---------------------------------------------------------------------------
# BasicBlock / layer / backbone forward
# ---------------------------------------------------------------------------
def basic_block_forward(x, bp):
    if bp["downsample"] is not None:
        residual = conv_generic(x, bp["downsample"], relu=False)
    else:
        residual = x
    if bp["conv1"]["kind"] == "tap":
        out = conv3x3_s1(x, bp["conv1"], relu=True)
    else:
        out = conv_generic(x, bp["conv1"], relu=True)
    out = conv3x3_s1(out, bp["conv2"], relu=True, residual_nhwc=residual)
    return out


def layer_forward(x, layer_params):
    for bp in layer_params:
        x = basic_block_forward(x, bp)
    return x


def resnet_backbone_forward(x_nchw, prepared):
    x = jnp.transpose(x_nchw, (0, 2, 3, 1))  # NCHW -> NHWC
    c1 = conv_generic(x, prepared["stem"], relu=True)
    c1 = maxpool2d_3x3_s2(c1)
    c2 = layer_forward(c1, prepared["layer1"])
    c3 = layer_forward(c2, prepared["layer2"])
    c4 = layer_forward(c3, prepared["layer3"])
    c5 = layer_forward(c4, prepared["layer4"])
    to_nchw = lambda t: jnp.transpose(t, (0, 3, 1, 2))
    return to_nchw(c2), to_nchw(c3), to_nchw(c4), to_nchw(c5)


# ---------------------------------------------------------------------------
# Deterministic parameter construction (shapes per the PyTorch __init__)
# ---------------------------------------------------------------------------
def _init_conv(key, cout, cin, k):
    fan = cin * k * k
    return jax.random.normal(key, (cout, cin, k, k), jnp.float32) / math.sqrt(fan)


def _init_bn(key, c):
    k1, k2, k3, k4 = jax.random.split(key, 4)
    return dict(
        gamma=1.0 + 0.1 * jax.random.normal(k1, (c,), jnp.float32),
        beta=0.1 * jax.random.normal(k2, (c,), jnp.float32),
        mean=0.1 * jax.random.normal(k3, (c,), jnp.float32),
        var=jnp.abs(1.0 + 0.1 * jax.random.normal(k4, (c,), jnp.float32)),
    )


def _make_block_params(key, inplanes, planes, stride, with_downsample):
    ks = jax.random.split(key, 6)
    p = dict(
        stride=stride,
        conv1_w=_init_conv(ks[0], planes, inplanes, 3),
        bn1=_init_bn(ks[1], planes),
        conv2_w=_init_conv(ks[2], planes, planes, 3),
        bn2=_init_bn(ks[3], planes),
        downsample=None,
    )
    if with_downsample:
        p["downsample"] = dict(w=_init_conv(ks[4], planes, inplanes, 1),
                               bn=_init_bn(ks[5], planes))
    return p


def make_params(key, resnet_version="resnet34"):
    cfgs = {"resnet18": [2, 2, 2, 2], "resnet34": [3, 4, 6, 3]}
    layers_cfg = cfgs[resnet_version]
    k_stem, k1, k2, k3, k4 = jax.random.split(key, 5)
    ks = jax.random.split(k_stem, 2)
    params = dict(conv1_w=_init_conv(ks[0], 64, 3, 7), bn1=_init_bn(ks[1], 64))
    inplanes = 64
    for name, planes, blocks, stride, lk in (
        ("layer1", 64, layers_cfg[0], 1, k1),
        ("layer2", 128, layers_cfg[1], 2, k2),
        ("layer3", 256, layers_cfg[2], 2, k3),
        ("layer4", 512, layers_cfg[3], 2, k4),
    ):
        bkeys = jax.random.split(lk, blocks)
        with_ds = (stride != 1) or (inplanes != planes)  # BasicBlock expansion=1
        layer = [_make_block_params(bkeys[0], inplanes, planes, stride, with_ds)]
        inplanes = planes
        for i in range(1, blocks):
            layer.append(_make_block_params(bkeys[i], inplanes, planes, 1, False))
        params[name] = layer
    return params


# ---------------------------------------------------------------------------
# Pure-JAX reference (same dtype policy as the kernels: _MXU_DTYPE operands,
# f32 accumulation — with the default f32 policy this is the plain float32
# semantics of the PyTorch module)
# ---------------------------------------------------------------------------
def _ref_conv_bn(x, w_oihw, bn, stride, pad, relu, residual=None):
    scale, shift = _fold_bn(bn)
    w_hwio = (jnp.transpose(w_oihw, (2, 3, 1, 0)) * scale).astype(_MXU_DTYPE)
    y = lax.conv_general_dilated(
        x.astype(_MXU_DTYPE), w_hwio, (stride, stride),
        [(pad, pad), (pad, pad)],
        dimension_numbers=("NHWC", "HWIO", "NHWC"),
        preferred_element_type=jnp.float32)
    y = y + shift
    if residual is not None:
        y = y + residual
    if relu:
        y = jnp.maximum(y, 0.0)
    return y


def _ref_forward(x_nchw, params):
    x = jnp.transpose(x_nchw, (0, 2, 3, 1))
    c1 = _ref_conv_bn(x, params["conv1_w"], params["bn1"], 2, 3, True)
    c1 = lax.reduce_window(c1, -jnp.inf, lax.max, (1, 3, 3, 1), (1, 2, 2, 1),
                           [(0, 0), (1, 1), (1, 1), (0, 0)])

    def block(x, p):
        if p["downsample"] is not None:
            r = _ref_conv_bn(x, p["downsample"]["w"], p["downsample"]["bn"],
                             p["stride"], 0, False)
        else:
            r = x
        o = _ref_conv_bn(x, p["conv1_w"], p["bn1"], p["stride"], 1, True)
        o = _ref_conv_bn(o, p["conv2_w"], p["bn2"], 1, 1, True, residual=r)
        return o

    def layer(x, lp):
        for bp in lp:
            x = block(x, bp)
        return x

    c2 = layer(c1, params["layer1"])
    c3 = layer(c2, params["layer2"])
    c4 = layer(c3, params["layer3"])
    c5 = layer(c4, params["layer4"])
    f = lambda t: jnp.transpose(t, (0, 3, 1, 2))
    return f(c2), f(c3), f(c4), f(c5)


if __name__ == "__main__":
    key = jax.random.PRNGKey(0)
    kx, kp = jax.random.split(key)
    # NCHW input, same convention as the PyTorch module.
    x = jax.random.normal(kx, (2, 3, 64, 64), jnp.float32)
    params = make_params(kp, "resnet34")
    prepared = prepare_params(params)

    outs = jax.block_until_ready(resnet_backbone_forward(x, prepared))
    refs = jax.block_until_ready(_ref_forward(x, params))

    expected_shapes = [(2, 64, 16, 16), (2, 128, 8, 8),
                       (2, 256, 4, 4), (2, 512, 2, 2)]
    for o, r, es in zip(outs, refs, expected_shapes):
        assert o.shape == es, (o.shape, es)
        err = float(jnp.max(jnp.abs(o - r)))
        scale = float(jnp.max(jnp.abs(r)))
        # Scale-aware check: summation-order noise on cancellation-heavy
        # elements must not fail the run; real indexing/layout bugs produce
        # errors at activation scale and would trip this.
        assert err <= 2e-2 * max(1.0, scale), (err, scale, es)
    print("KERNEL_OK")
</pallas_src>

<mosaic_0001>
module attributes {stable_mosaic.version = 11 : i64} {
  func.func @_mm_kernel(%arg0: i32, %arg1: i32, %arg2: i32, %arg3: memref<512x147xf32, #tpu.memory_space<vmem>>, %arg4: memref<147x64xf32, #tpu.memory_space<vmem>>, %arg5: memref<1x64xf32, #tpu.memory_space<vmem>>, %arg6: memref<512x64xf32, #tpu.memory_space<vmem>>, %arg7: memref<512x64xf32, #tpu.memory_space<vmem>>) attributes {dimension_semantics = [#tpu.dimension_semantics<parallel>, #tpu.dimension_semantics<parallel>, #tpu.dimension_semantics<arbitrary>], iteration_bounds = array<i64: 4, 1, 1>, scalar_prefetch = 0 : i64, scratch_operands = 1 : i64, tpu.core_type = #tpu.core_type<tc>, window_params = [{transform_indices = @transform_0, window_bounds = array<i64: 512, 147>}, {transform_indices = @transform_1, window_bounds = array<i64: 147, 64>}, {transform_indices = @transform_2, window_bounds = array<i64: 1, 64>}, {transform_indices = @transform_3, window_bounds = array<i64: 512, 64>}]} {
    %c0_i32 = arith.constant 0 : i32
    %0 = arith.cmpi eq, %arg2, %c0_i32 : i32
    %1 = arith.extui %0 : i1 to i32
    %c0_i32_0 = arith.constant 0 : i32
    %2 = arith.cmpi ne, %1, %c0_i32_0 : i32
    scf.if %2 {
      %cst_10 = arith.constant 0.000000e+00 : f32
      %12 = vector.broadcast %cst_10 : f32 to vector<512x64xf32>
      %c0_11 = arith.constant 0 : index
      %c0_12 = arith.constant 0 : index
      %13 = vector.load %arg7[%c0_11, %c0_12] : memref<512x64xf32, #tpu.memory_space<vmem>>, vector<512x64xf32>
      tpu.vector_store %arg7[%c0_11, %c0_12], %12 {strides = array<i32>} : memref<512x64xf32, #tpu.memory_space<vmem>>, vector<512x64xf32>,
    } else {
    }
    %c0 = arith.constant 0 : index
    %c0_1 = arith.constant 0 : index
    %3 = vector.load %arg7[%c0, %c0_1] : memref<512x64xf32, #tpu.memory_space<vmem>>, vector<512x64xf32>
    %c0_2 = arith.constant 0 : index
    %c0_3 = arith.constant 0 : index
    %4 = vector.load %arg3[%c0_2, %c0_3] : memref<512x147xf32, #tpu.memory_space<vmem>>, vector<512x147xf32>
    %c0_4 = arith.constant 0 : index
    %c0_5 = arith.constant 0 : index
    %5 = vector.load %arg4[%c0_4, %c0_5] : memref<147x64xf32, #tpu.memory_space<vmem>>, vector<147x64xf32>
    %cst = arith.constant dense<0.000000e+00> : vector<512x64xf32>
    %6 = tpu.matmul %4, %5, %cst {dimension_numbers = #tpu.dot_dimension_numbers<[1], [0], [0], [1], [0, 0, 1, 1], [], []>} : vector<512x147xf32>, vector<147x64xf32>, vector<512x64xf32> -> vector<512x64xf32>
    %7 = arith.addf %3, %6 : vector<512x64xf32>
    %c0_6 = arith.constant 0 : index
    %c0_7 = arith.constant 0 : index
    %8 = vector.load %arg7[%c0_6, %c0_7] : memref<512x64xf32, #tpu.memory_space<vmem>>, vector<512x64xf32>
    tpu.vector_store %arg7[%c0_6, %c0_7], %7 {strides = array<i32>} : memref<512x64xf32, #tpu.memory_space<vmem>>, vector<512x64xf32>,
    %c0_i32_8 = arith.constant 0 : i32
    %9 = arith.cmpi eq, %arg2, %c0_i32_8 : i32
    %10 = arith.extui %9 : i1 to i32
    %c0_i32_9 = arith.constant 0 : i32
    %11 = arith.cmpi ne, %10, %c0_i32_9 : i32
    scf.if %11 {
      %c0_10 = arith.constant 0 : index
      %c0_11 = arith.constant 0 : index
      %12 = vector.load %arg7[%c0_10, %c0_11] : memref<512x64xf32, #tpu.memory_space<vmem>>, vector<512x64xf32>
      %c0_12 = arith.constant 0 : index
      %c0_13 = arith.constant 0 : index
      %13 = vector.load %arg5[%c0_12, %c0_13] : memref<1x64xf32, #tpu.memory_space<vmem>>, vector<1x64xf32>
      %14 = vector.broadcast %13 : vector<1x64xf32> to vector<512x64xf32>
      %15 = arith.addf %12, %14 : vector<512x64xf32>
      %cst_14 = arith.constant 0.000000e+00 : f32
      %16 = vector.broadcast %cst_14 : f32 to vector<512x64xf32>
      %17 = arith.maximumf %15, %16 : vector<512x64xf32>
      %c0_15 = arith.constant 0 : index
      %c0_16 = arith.constant 0 : index
      %18 = vector.load %arg6[%c0_15, %c0_16] : memref<512x64xf32, #tpu.memory_space<vmem>>, vector<512x64xf32>
      tpu.vector_store %arg6[%c0_15, %c0_16], %17 {strides = array<i32>} : memref<512x64xf32, #tpu.memory_space<vmem>>, vector<512x64xf32>,
    } else {
    }
    return
  }
  func.func @transform_0(%arg0: i32, %arg1: i32, %arg2: i32) -> (i32, i32) {
    %c0_i32 = arith.constant 0 : i32
    return %arg0, %arg2 : i32, i32
  }
  func.func @transform_1(%arg0: i32, %arg1: i32, %arg2: i32) -> (i32, i32) {
    %c0_i32 = arith.constant 0 : i32
    return %arg2, %arg1 : i32, i32
  }
  func.func @transform_2(%arg0: i32, %arg1: i32, %arg2: i32) -> (i32, i32) {
    %c0_i32 = arith.constant 0 : i32
    %c0_i32_0 = arith.constant 0 : i32
    return %c0_i32, %arg1 : i32, i32
  }
  func.func @transform_3(%arg0: i32, %arg1: i32, %arg2: i32) -> (i32, i32) {
    %c0_i32 = arith.constant 0 : i32
    return %arg0, %arg1 : i32, i32
  }
}

</mosaic_0001>

<llo_original>
// kernel: tpu_custom_call.1
$region0: #{tpu_custom_call.1}
  #allocation0 [shape = 'u32[]', space=smem, size = 0x4, offset = 0x4, fixed_abs, tag = 'smem constant byte address 0x4 - core index']
  #allocation1 [shape = 'u32[144,128]{1,0:T(1,128)}', space=vmem, size = 0x12000, scoped, tag = 'internal scratch']
  #allocation2 [shape = 'f32[512,64]{1,0:T(8,128)}', space=vmem, size = 0x40000, scoped, tag = 'scratch operand']
  %s0 = inlined_call_operand.vmem [shape: f32[2048,147], index: 0, kind: input, shape index: {}]
  %s1 = inlined_call_operand.vmem [shape: f32[147,64], index: 1, kind: input, shape index: {}]
  %s2 = inlined_call_operand.vmem [shape: f32[1,64], index: 2, kind: input, shape index: {}]
  %s3 = inlined_call_operand.vmem [shape: f32[2048,64], index: 3, kind: output, shape index: {}]
  %s4 = sld [smem:[#allocation0]]
  $region53: #{tpu_custom_call.1} parent=0
    _
  %s6 = ssub.s32 1, %s4
  %s7 = scalar_select 0, %s6, %s4
  loop: start=0, step=1, limit=6
  $region2: #{tpu_custom_call.1} parent=0 // loop_pre_header
    _
  $region3: #{tpu_custom_call.1} parent=0 // loop_header
    %s9 = sphi 0, %s13
    %p10 = scmp.ge.s32.totalorder %s9, 6
    %s16 = sphi 0, %s35
    %s17 = sphi 0, %s31
    %s18 = sphi 0, %s27
    %s19 = sphi 0, %s16
    %s20 = sphi 0, %s17
    %s21 = sphi 0, %s18
    %s22 = sphi 0, %s19
    %s23 = sphi 0, %s20
    %s24 = sphi 0, %s21
    %s40 = sphi 0, %s42
    %s43 = sphi 0, %s40
    %s44 = sphi 0, %s43
    %s60 = sphi 0, %s44
    %s68 = sphi 0, %s70
    %s71 = sphi 0, %s68
    %s72 = sphi 0, %s71
    %s88 = sphi 0, %s72
    %s94 = sphi 0, %s96
    %s97 = sphi 0, %s94
    %s98 = sphi 0, %s97
    %s114 = sphi 0, %s98
    %s122 = sphi 0, %s124
    %s125 = sphi 0, %s122
    %s126 = sphi 0, %s125
    %s142 = sphi 0, %s126
  $region4: #{tpu_custom_call.1} parent=0 // loop_header_branch
    %12 = sbr.rel (%p10) target = $region8
  $region5: #{tpu_custom_call.1} parent=0 // loop_body
    %s14 = ssub.s32 %s9, 1
    %s15 = ssub.s32 %s9, 2
    %s25 = sadd.s32 1, %s18
    %p26 = scmp.ge.s32.totalorder %s25, 1
    %s27 = scalar_select %p26, 0, %s25
    %s28 = sadd.s32 1, %s17
    %s29 = scalar_select %p26, %s28, %s17
    %p30 = scmp.ge.s32.totalorder %s29, 1
    %s31 = scalar_select %p30, 0, %s29
    %s32 = sadd.s32 1, %s16
    %s33 = scalar_select %p30, %s32, %s16
    %p34 = scmp.ge.s32.totalorder %s33, 4
    %s35 = scalar_select %p34, 0, %s33
    %s36 = ssub.s32 %s16, %s35
    %s37 = ssub.s32 %s18, %s27
    %s38 = sor.u32 %s36, %s37
    %p39 = scmp.eq.s32.totalorder %s38, 0
    %s41 = sadd.s32 %s40, 1
    %s42 = scalar_select %p39, %s40, %s41
    %p45 = pneg %p39
    %p46 = scmp.eq.s32.totalorder %s9, 3
    %p47 = por %p45, %p46
    %p48 = scmp.ne.s32.totalorder %s40, %s43
    %p49 = scmp.eq.s32.totalorder %s9, 0
    %p50 = por %p48, %p49
    %p51 = scmp.ne.s32.totalorder %s40, %s43
    %p52 = scmp.eq.s32.totalorder %s14, 3
    %p53 = por %p51, %p52
    %p54 = scmp.ne.s32.totalorder %s43, %s44
    %p55 = scmp.eq.s32.totalorder %s14, 0
    %p56 = por %p54, %p55
    %p57 = scmp.ne.s32.totalorder %s43, %s44
    %p58 = scmp.eq.s32.totalorder %s15, 3
    %p59 = por %p57, %p58
    %p61 = scmp.ne.s32.totalorder %s44, %s60
    %p62 = scmp.eq.s32.totalorder %s15, 0
    %p63 = por %p61, %p62
    %s64 = ssub.s32 %s18, %s27
    %s65 = ssub.s32 %s17, %s31
    %s66 = sor.u32 %s64, %s65
    %p67 = scmp.eq.s32.totalorder %s66, 0
    %s69 = sadd.s32 %s68, 1
    %s70 = scalar_select %p67, %s68, %s69
    %p73 = pneg %p67
    %p74 = scmp.eq.s32.totalorder %s9, 3
    %p75 = por %p73, %p74
    %p76 = scmp.ne.s32.totalorder %s68, %s71
    %p77 = scmp.eq.s32.totalorder %s9, 0
    %p78 = por %p76, %p77
    %p79 = scmp.ne.s32.totalorder %s68, %s71
    %p80 = scmp.eq.s32.totalorder %s14, 3
    %p81 = por %p79, %p80
    %p82 = scmp.ne.s32.totalorder %s71, %s72
    %p83 = scmp.eq.s32.totalorder %s14, 0
    %p84 = por %p82, %p83
    %p85 = scmp.ne.s32.totalorder %s71, %s72
    %p86 = scmp.eq.s32.totalorder %s15, 3
    %p87 = por %p85, %p86
    %p89 = scmp.ne.s32.totalorder %s72, %s88
    %p90 = scmp.eq.s32.totalorder %s15, 0
    %p91 = por %p89, %p90
    %s92 = ssub.s32 %s17, %s31
    %p93 = scmp.eq.s32.totalorder %s92, 0
    %s95 = sadd.s32 %s94, 1
    %s96 = scalar_select %p93, %s94, %s95
    %p99 = pneg %p93
    %p100 = scmp.eq.s32.totalorder %s9, 3
    %p101 = por %p99, %p100
    %p102 = scmp.ne.s32.totalorder %s94, %s97
    %p103 = scmp.eq.s32.totalorder %s9, 0
    %p104 = por %p102, %p103
    %p105 = scmp.ne.s32.totalorder %s94, %s97
    %p106 = scmp.eq.s32.totalorder %s14, 3
    %p107 = por %p105, %p106
    %p108 = scmp.ne.s32.totalorder %s97, %s98
    %p109 = scmp.eq.s32.totalorder %s14, 0
    %p110 = por %p108, %p109
    %p111 = scmp.ne.s32.totalorder %s97, %s98
    %p112 = scmp.eq.s32.totalorder %s15, 3
    %p113 = por %p111, %p112
    %p115 = scmp.ne.s32.totalorder %s98, %s114
    %p116 = scmp.eq.s32.totalorder %s15, 0
    %p117 = por %p115, %p116
    %s118 = ssub.s32 %s16, %s35
    %s119 = ssub.s32 %s17, %s31
    %s120 = sor.u32 %s118, %s119
    %p121 = scmp.eq.s32.totalorder %s120, 0
    %s123 = sadd.s32 %s122, 1
    %s124 = scalar_select %p121, %s122, %s123
    %p127 = pneg %p121
    %p128 = scmp.eq.s32.totalorder %s9, 3
    %p129 = por %p127, %p128
    %p130 = scmp.ne.s32.totalorder %s122, %s125
    %p131 = scmp.eq.s32.totalorder %s9, 0
    %p132 = por %p130, %p131
    %p133 = scmp.ne.s32.totalorder %s122, %s125
    %p134 = scmp.eq.s32.totalorder %s14, 3
    %p135 = por %p133, %p134
    %p136 = scmp.ne.s32.totalorder %s125, %s126
    %p137 = scmp.eq.s32.totalorder %s14, 0
    %p138 = por %p136, %p137
    %p139 = scmp.ne.s32.totalorder %s125, %s126
    %p140 = scmp.eq.s32.totalorder %s15, 3
    %p141 = por %p139, %p140
    %p143 = scmp.ne.s32.totalorder %s126, %s142
    %p144 = scmp.eq.s32.totalorder %s15, 0
    %p145 = por %p143, %p144
    %p146 = scmp.le.s32.totalorder 1, %s9
    %p147 = scmp.lt.s32.totalorder %s9, 5
    %p148 = pnand %p146, %p147
    %p149 = pneg %p148
    // Predicated region
    $region9: #{tpu_custom_call.1} parent=5 // pred_check
      _
    $region10: #{tpu_custom_call.1} parent=5 // pred_check_branch
      %151 = sbr.rel (%p148) target = $region12
    $region11: #{tpu_custom_call.1} parent=5 // pred_region
      %s152 = ssub.s32 %s9, 1
      // Predicated region
      $region13: #{tpu_custom_call.1} parent=11 // pred_check
        %p153 = pneg %p84
      $region14: #{tpu_custom_call.1} parent=11 // pred_check_branch
        %155 = sbr.rel (%p153) target = $region16
      $region15: #{tpu_custom_call.1} parent=11 // pred_region
        %s156 = smul.u32 19, %s21
        %p157 = scmp.lt.s32.totalorder %s156, 18
        %s158 = scalar_select %p157, %s156, 18
        %p159 = scmp.lt.s32.totalorder %s20, 0
        %s160 = scalar_select %p159, %s20, 0
        %s161 = sadd.s32 %s160, %s158
        %s162 = smul.addr %s161, 8
        %s163 = scalar_lea.vmem %s1, %s162
        %s164 = smul.u32 19, %s21
      $region16: #{tpu_custom_call.1} parent=11 // pred_fallthru
        _
      // Predicated region
      $region17: #{tpu_custom_call.1} parent=11 // pred_check
        %p165 = pneg %p110
      $region18: #{tpu_custom_call.1} parent=11 // pred_check_branch
        %167 = sbr.rel (%p165) target = $region20
      $region19: #{tpu_custom_call.1} parent=11 // pred_region
        %p168 = scmp.lt.s32.totalorder %s20, 0
        %s169 = scalar_select %p168, %s20, 0
        %s170 = scalar_lea.vmem %s2, %s169
      $region20: #{tpu_custom_call.1} parent=11 // pred_fallthru
        _
    $region12: #{tpu_custom_call.1} parent=5 // pred_fallthru
      _
    %p171 = scmp.lt.s32.totalorder %s9, 4
    // Predicated region
    $region21: #{tpu_custom_call.1} parent=5 // pred_check
      %p172 = pneg %p171
    $region22: #{tpu_custom_call.1} parent=5 // pred_check_branch
      %174 = sbr.rel (%p172) target = $region24
    $region23: #{tpu_custom_call.1} parent=5 // pred_region
      // Predicated region
      $region25: #{tpu_custom_call.1} parent=23 // pred_check
        %p175 = pneg %p50
      $region26: #{tpu_custom_call.1} parent=23 // pred_check_branch
        %177 = sbr.rel (%p175) target = $region28
      $region27: #{tpu_custom_call.1} parent=23 // pred_region
        %s178 = smul.u32 64, %s16
        %s179 = smul.u32 2, %s18
        %p180 = scmp.lt.s32.totalorder %s178, 255
        %s181 = scalar_select %p180, %s178, 255
        %p182 = scmp.lt.s32.totalorder %s179, 1
        %s183 = scalar_select %p182, %s179, 1
        %s184 = smul.addr %s181, 2
        %s185 = sadd.s32 %s183, %s184
        %s186 = smul.addr %s185, 8
        %s187 = scalar_lea.vmem %s0, %s186
        %s188 = smul.u32 64, %s16
        %s189 = smul.u32 2, %s18
      $region28: #{tpu_custom_call.1} parent=23 // pred_fallthru
        _
    $region24: #{tpu_custom_call.1} parent=5 // pred_fallthru
      _
    %p190 = scmp.le.s32.totalorder 1, %s9
    %p191 = scmp.lt.s32.totalorder %s9, 5
    %p192 = pnand %p190, %p191
    %p193 = pneg %p192
    // Predicated region
    $region29: #{tpu_custom_call.1} parent=5 // pred_check
      _
    $region30: #{tpu_custom_call.1} parent=5 // pred_check_branch
      %195 = sbr.rel (%p192) target = $region32
    $region31: #{tpu_custom_call.1} parent=5 // pred_region
      %s196 = ssub.s32 %s9, 1
      %s197 = smul.u32 64, %s19
      %s198 = smul.u32 2, %s21
      %p199 = scmp.lt.s32.totalorder %s197, 255
      %s200 = scalar_select %p199, %s197, 255
      %p201 = scmp.lt.s32.totalorder %s198, 1
      %s202 = scalar_select %p201, %s198, 1
      %s203 = smul.addr %s200, 2
      %s204 = sadd.s32 %s202, %s203
      %s205 = smul.addr %s204, 8
      %s206 = scalar_lea.vmem %s0, %s205
      %p207 = pneg %p56
      %p208 = pneg %p53
      %s209 = smul.u32 19, %s21
      %p210 = scmp.lt.s32.totalorder %s209, 18
      %s211 = scalar_select %p210, %s209, 18
      %p212 = scmp.lt.s32.totalorder %s20, 0
      %s213 = scalar_select %p212, %s20, 0
      %s214 = sadd.s32 %s213, %s211
      %s215 = smul.addr %s214, 8
      %s216 = scalar_lea.vmem %s1, %s215
      %p217 = pneg %p84
      %p218 = pneg %p81
      %p219 = scmp.lt.s32.totalorder %s20, 0
      %s220 = scalar_select %p219, %s20, 0
      %s221 = scalar_lea.vmem %s2, %s220
      %p222 = pneg %p110
      %p223 = pneg %p107
      %p224 = pneg %p138
      %p225 = pneg %p135
      %s226 = smul.u32 64, %s19
      %p227 = scmp.lt.s32.totalorder %s226, 255
      %s228 = scalar_select %p227, %s226, 255
      %p229 = scmp.lt.s32.totalorder %s20, 0
      %s230 = scalar_select %p229, %s20, 0
      %s231 = sadd.s32 %s230, %s228
      %s232 = smul.addr %s231, 8
      %s233 = scalar_lea.vmem %s3, %s232
      %s234 = smul.u32 64, %s19
      %s235 = smul.u32 2, %s21
      %p236 = scmp.lt.s32.totalorder %s234, 255
      %s237 = scalar_select %p236, %s234, 255
      %p238 = scmp.lt.s32.totalorder %s235, 1
      %s239 = scalar_select %p238, %s235, 1
      %s240 = smul.addr %s237, 2
      %s241 = sadd.s32 %s239, %s240
      %s242 = smul.addr %s241, 8
      %s243 = scalar_lea.vmem %s0, %s242
      %s244 = smul.u32 64, %s19
      %s245 = smul.u32 2, %s21
      %s246 = smul.u32 19, %s21
      %p247 = scmp.lt.s32.totalorder %s246, 18
      %s248 = scalar_select %p247, %s246, 18
      %p249 = scmp.lt.s32.totalorder %s20, 0
      %s250 = scalar_select %p249, %s20, 0
      %s251 = sadd.s32 %s250, %s248
      %s252 = smul.addr %s251, 8
      %s253 = scalar_lea.vmem %s1, %s252
      %s254 = smul.u32 19, %s21
      %p255 = scmp.lt.s32.totalorder %s20, 0
      %s256 = scalar_select %p255, %s20, 0
      %s257 = scalar_lea.vmem %s2, %s256
      %s258 = smul.u32 64, %s19
      %p259 = scmp.lt.s32.totalorder %s258, 255
      %s260 = scalar_select %p259, %s258, 255
      %p261 = scmp.lt.s32.totalorder %s20, 0
      %s262 = scalar_select %p261, %s20, 0
      %s263 = sadd.s32 %s262, %s260
      %s264 = smul.addr %s263, 8
      %s265 = scalar_lea.vmem %s3, %s264
      %s266 = smul.u32 64, %s19
      %p267 = scmp.eq.s32.totalorder %s21, 0
      // Predicated region
      $region33: #{tpu_custom_call.1} parent=31 // pred_check
        %p268 = pneg %p267
      $region34: #{tpu_custom_call.1} parent=31 // pred_check_branch
        %270 = sbr.rel (%p268) target = $region36
      $region35: #{tpu_custom_call.1} parent=31 // pred_region
        %vm271 = vcmask 523264
        %272 = vst.msk [vmem:[#allocation2] sm:$0xff] %vm271, 0.0
        %273 = vst.msk [vmem:[#allocation2 + $0x8] sm:$0xff] %vm271, 0.0
        %274 = vst.msk [vmem:[#allocation2 + $0x10] sm:$0xff] %vm271, 0.0
        %275 = vst.msk [vmem:[#allocation2 + $0x18] sm:$0xff] %vm271, 0.0
        %276 = vst.msk [vmem:[#allocation2 + $0x20] sm:$0xff] %vm271, 0.0
        %277 = vst.msk [vmem:[#allocation2 + $0x28] sm:$0xff] %vm271, 0.0
        %278 = vst.msk [vmem:[#allocation2 + $0x30] sm:$0xff] %vm271, 0.0
        %279 = vst.msk [vmem:[#allocation2 + $0x38] sm:$0xff] %vm271, 0.0
        %280 = vst.msk [vmem:[#allocation2 + $0x40] sm:$0xff] %vm271, 0.0
        %281 = vst.msk [vmem:[#allocation2 + $0x48] sm:$0xff] %vm271, 0.0
        %282 = vst.msk [vmem:[#allocation2 + $0x50] sm:$0xff] %vm271, 0.0
        %283 = vst.msk [vmem:[#allocation2 + $0x58] sm:$0xff] %vm271, 0.0
        %284 = vst.msk [vmem:[#allocation2 + $0x60] sm:$0xff] %vm271, 0.0
        %285 = vst.msk [vmem:[#allocation2 + $0x68] sm:$0xff] %vm271, 0.0
        %286 = vst.msk [vmem:[#allocation2 + $0x70] sm:$0xff] %vm271, 0.0
        %287 = vst.msk [vmem:[#allocation2 + $0x78] sm:$0xff] %vm271, 0.0
        %288 = vst.msk [vmem:[#allocation2 + $0x80] sm:$0xff] %vm271, 0.0
        %289 = vst.msk [vmem:[#allocation2 + $0x88] sm:$0xff] %vm271, 0.0
        %290 = vst.msk [vmem:[#allocation2 + $0x90] sm:$0xff] %vm271, 0.0
        %291 = vst.msk [vmem:[#allocation2 + $0x98] sm:$0xff] %vm271, 0.0
        %292 = vst.msk [vmem:[#allocation2 + $0xa0] sm:$0xff] %vm271, 0.0
        %293 = vst.msk [vmem:[#allocation2 + $0xa8] sm:$0xff] %vm271, 0.0
        %294 = vst.msk [vmem:[#allocation2 + $0xb0] sm:$0xff] %vm271, 0.0
        %295 = vst.msk [vmem:[#allocation2 + $0xb8] sm:$0xff] %vm271, 0.0
        %296 = vst.msk [vmem:[#allocation2 + $0xc0] sm:$0xff] %vm271, 0.0
        %297 = vst.msk [vmem:[#allocation2 + $0xc8] sm:$0xff] %vm271, 0.0
        %298 = vst.msk [vmem:[#allocation2 + $0xd0] sm:$0xff] %vm271, 0.0
        %299 = vst.msk [vmem:[#allocation2 + $0xd8] sm:$0xff] %vm271, 0.0
        %300 = vst.msk [vmem:[#allocation2 + $0xe0] sm:$0xff] %vm271, 0.0
        %301 = vst.msk [vmem:[#allocation2 + $0xe8] sm:$0xff] %vm271, 0.0
        %302 = vst.msk [vmem:[#allocation2 + $0xf0] sm:$0xff] %vm271, 0.0
        %303 = vst.msk [vmem:[#allocation2 + $0xf8] sm:$0xff] %vm271, 0.0
        %304 = vst.msk [vmem:[#allocation2 + $0x100] sm:$0xff] %vm271, 0.0
        %305 = vst.msk [vmem:[#allocation2 + $0x108] sm:$0xff] %vm271, 0.0
        %306 = vst.msk [vmem:[#allocation2 + $0x110] sm:$0xff] %vm271, 0.0
        %307 = vst.msk [vmem:[#allocation2 + $0x118] sm:$0xff] %vm271, 0.0
        %308 = vst.msk [vmem:[#allocation2 + $0x120] sm:$0xff] %vm271, 0.0
        %309 = vst.msk [vmem:[#allocation2 + $0x128] sm:$0xff] %vm271, 0.0
        %310 = vst.msk [vmem:[#allocation2 + $0x130] sm:$0xff] %vm271, 0.0
        %311 = vst.msk [vmem:[#allocation2 + $0x138] sm:$0xff] %vm271, 0.0
        %312 = vst.msk [vmem:[#allocation2 + $0x140] sm:$0xff] %vm271, 0.0
        %313 = vst.msk [vmem:[#allocation2 + $0x148] sm:$0xff] %vm271, 0.0
        %314 = vst.msk [vmem:[#allocation2 + $0x150] sm:$0xff] %vm271, 0.0
        %315 = vst.msk [vmem:[#allocation2 + $0x158] sm:$0xff] %vm271, 0.0
        %316 = vst.msk [vmem:[#allocation2 + $0x160] sm:$0xff] %vm271, 0.0
        %317 = vst.msk [vmem:[#allocation2 + $0x168] sm:$0xff] %vm271, 0.0
        %318 = vst.msk [vmem:[#allocation2 + $0x170] sm:$0xff] %vm271, 0.0
        %319 = vst.msk [vmem:[#allocation2 + $0x178] sm:$0xff] %vm271, 0.0
        %320 = vst.msk [vmem:[#allocation2 + $0x180] sm:$0xff] %vm271, 0.0
        %321 = vst.msk [vmem:[#allocation2 + $0x188] sm:$0xff] %vm271, 0.0
        %322 = vst.msk [vmem:[#allocation2 + $0x190] sm:$0xff] %vm271, 0.0
        %323 = vst.msk [vmem:[#allocation2 + $0x198] sm:$0xff] %vm271, 0.0
        %324 = vst.msk [vmem:[#allocation2 + $0x1a0] sm:$0xff] %vm271, 0.0
        %325 = vst.msk [vmem:[#allocation2 + $0x1a8] sm:$0xff] %vm271, 0.0
        %326 = vst.msk [vmem:[#allocation2 + $0x1b0] sm:$0xff] %vm271, 0.0
        %327 = vst.msk [vmem:[#allocation2 + $0x1b8] sm:$0xff] %vm271, 0.0
        %328 = vst.msk [vmem:[#allocation2 + $0x1c0] sm:$0xff] %vm271, 0.0
        %329 = vst.msk [vmem:[#allocation2 + $0x1c8] sm:$0xff] %vm271, 0.0
        %330 = vst.msk [vmem:[#allocation2 + $0x1d0] sm:$0xff] %vm271, 0.0
        %331 = vst.msk [vmem:[#allocation2 + $0x1d8] sm:$0xff] %vm271, 0.0
        %332 = vst.msk [vmem:[#allocation2 + $0x1e0] sm:$0xff] %vm271, 0.0
        %333 = vst.msk [vmem:[#allocation2 + $0x1e8] sm:$0xff] %vm271, 0.0
        %334 = vst.msk [vmem:[#allocation2 + $0x1f0] sm:$0xff] %vm271, 0.0
        %335 = vst.msk [vmem:[#allocation2 + $0x1f8] sm:$0xff] %vm271, 0.0
      $region36: #{tpu_custom_call.1} parent=31 // pred_fallthru
        _
      %v336 = vld [vmem:[#allocation2] sm:$0xff]
      %v337 = vld [vmem:[#allocation2 + $0x8] sm:$0xff]
      %v338 = vld [vmem:[#allocation2 + $0x10] sm:$0xff]
      %v339 = vld [vmem:[#allocation2 + $0x18] sm:$0xff]
      %v340 = vld [vmem:[#allocation2 + $0x20] sm:$0xff]
      %v341 = vld [vmem:[#allocation2 + $0x28] sm:$0xff]
      %v342 = vld [vmem:[#allocation2 + $0x30] sm:$0xff]
      %v343 = vld [vmem:[#allocation2 + $0x38] sm:$0xff]
      %v344 = vld [vmem:[#allocation2 + $0x40] sm:$0xff]
      %v345 = vld [vmem:[#allocation2 + $0x48] sm:$0xff]
      %v346 = vld [vmem:[#allocation2 + $0x50] sm:$0xff]
      %v347 = vld [vmem:[#allocation2 + $0x58] sm:$0xff]
      %v348 = vld [vmem:[#allocation2 + $0x60] sm:$0xff]
      %v349 = vld [vmem:[#allocation2 + $0x68] sm:$0xff]
      %v350 = vld [vmem:[#allocation2 + $0x70] sm:$0xff]
      %v351 = vld [vmem:[#allocation2 + $0x78] sm:$0xff]
      %v352 = vld [vmem:[#allocation2 + $0x80] sm:$0xff]
      %v353 = vld [vmem:[#allocation2 + $0x88] sm:$0xff]
      %v354 = vld [vmem:[#allocation2 + $0x90] sm:$0xff]
      %v355 = vld [vmem:[#allocation2 + $0x98] sm:$0xff]
      %v356 = vld [vmem:[#allocation2 + $0xa0] sm:$0xff]
      %v357 = vld [vmem:[#allocation2 + $0xa8] sm:$0xff]
      %v358 = vld [vmem:[#allocation2 + $0xb0] sm:$0xff]
      %v359 = vld [vmem:[#allocation2 + $0xb8] sm:$0xff]
      %v360 = vld [vmem:[#allocation2 + $0xc0] sm:$0xff]
      %v361 = vld [vmem:[#allocation2 + $0xc8] sm:$0xff]
      %v362 = vld [vmem:[#allocation2 + $0xd0] sm:$0xff]
      %v363 = vld [vmem:[#allocation2 + $0xd8] sm:$0xff]
      %v364 = vld [vmem:[#allocation2 + $0xe0] sm:$0xff]
      %v365 = vld [vmem:[#allocation2 + $0xe8] sm:$0xff]
      %v366 = vld [vmem:[#allocation2 + $0xf0] sm:$0xff]
      %v367 = vld [vmem:[#allocation2 + $0xf8] sm:$0xff]
      %v368 = vld [vmem:[#allocation2 + $0x100] sm:$0xff]
      %v369 = vld [vmem:[#allocation2 + $0x108] sm:$0xff]
      %v370 = vld [vmem:[#allocation2 + $0x110] sm:$0xff]
      %v371 = vld [vmem:[#allocation2 + $0x118] sm:$0xff]
      %v372 = vld [vmem:[#allocation2 + $0x120] sm:$0xff]
      %v373 = vld [vmem:[#allocation2 + $0x128] sm:$0xff]
      %v374 = vld [vmem:[#allocation2 + $0x130] sm:$0xff]
      %v375 = vld [vmem:[#allocation2 + $0x138] sm:$0xff]
      %v376 = vld [vmem:[#allocation2 + $0x140] sm:$0xff]
      %v377 = vld [vmem:[#allocation2 + $0x148] sm:$0xff]
      %v378 = vld [vmem:[#allocation2 + $0x150] sm:$0xff]
      %v379 = vld [vmem:[#allocation2 + $0x158] sm:$0xff]
      %v380 = vld [vmem:[#allocation2 + $0x160] sm:$0xff]
      %v381 = vld [vmem:[#allocation2 + $0x168] sm:$0xff]
      %v382 = vld [vmem:[#allocation2 + $0x170] sm:$0xff]
      %v383 = vld [vmem:[#allocation2 + $0x178] sm:$0xff]
      %v384 = vld [vmem:[#allocation2 + $0x180] sm:$0xff]
      %v385 = vld [vmem:[#allocation2 + $0x188] sm:$0xff]
      %v386 = vld [vmem:[#allocation2 + $0x190] sm:$0xff]
      %v387 = vld [vmem:[#allocation2 + $0x198] sm:$0xff]
      %v388 = vld [vmem:[#allocation2 + $0x1a0] sm:$0xff]
      %v389 = vld [vmem:[#allocation2 + $0x1a8] sm:$0xff]
      %v390 = vld [vmem:[#allocation2 + $0x1b0] sm:$0xff]
      %v391 = vld [vmem:[#allocation2 + $0x1b8] sm:$0xff]
      %v392 = vld [vmem:[#allocation2 + $0x1c0] sm:$0xff]
      %v393 = vld [vmem:[#allocation2 + $0x1c8] sm:$0xff]
      %v394 = vld [vmem:[#allocation2 + $0x1d0] sm:$0xff]
      %v395 = vld [vmem:[#allocation2 + $0x1d8] sm:$0xff]
      %v396 = vld [vmem:[#allocation2 + $0x1e0] sm:$0xff]
      %v397 = vld [vmem:[#allocation2 + $0x1e8] sm:$0xff]
      %v398 = vld [vmem:[#allocation2 + $0x1f0] sm:$0xff]
      %v399 = vld [vmem:[#allocation2 + $0x1f8] sm:$0xff]
      %v400 = vld [vmem:[%s243] sm:$0xff]
      %v401 = vld [vmem:[%s243 + $0x8] sm:$0xff]
      %v402 = vld [vmem:[%s243 + $0x10] sm:$0xff]
      %v403 = vld [vmem:[%s243 + $0x18] sm:$0xff]
      %v404 = vld [vmem:[%s243 + $0x20] sm:$0xff]
      %v405 = vld [vmem:[%s243 + $0x28] sm:$0xff]
      %v406 = vld [vmem:[%s243 + $0x30] sm:$0xff]
      %v407 = vld [vmem:[%s243 + $0x38] sm:$0xff]
      %v408 = vld [vmem:[%s243 + $0x40] sm:$0xff]
      %v409 = vld [vmem:[%s243 + $0x48] sm:$0xff]
      %v410 = vld [vmem:[%s243 + $0x50] sm:$0xff]
      %v411 = vld [vmem:[%s243 + $0x58] sm:$0xff]
      %v412 = vld [vmem:[%s243 + $0x60] sm:$0xff]
      %v413 = vld [vmem:[%s243 + $0x68] sm:$0xff]
      %v414 = vld [vmem:[%s243 + $0x70] sm:$0xff]
      %v415 = vld [vmem:[%s243 + $0x78] sm:$0xff]
      %v416 = vld [vmem:[%s243 + $0x80] sm:$0xff]
      %v417 = vld [vmem:[%s243 + $0x88] sm:$0xff]
      %v418 = vld [vmem:[%s243 + $0x90] sm:$0xff]
      %v419 = vld [vmem:[%s243 + $0x98] sm:$0xff]
      %v420 = vld [vmem:[%s243 + $0xa0] sm:$0xff]
      %v421 = vld [vmem:[%s243 + $0xa8] sm:$0xff]
      %v422 = vld [vmem:[%s243 + $0xb0] sm:$0xff]
      %v423 = vld [vmem:[%s243 + $0xb8] sm:$0xff]
      %v424 = vld [vmem:[%s243 + $0xc0] sm:$0xff]
      %v425 = vld [vmem:[%s243 + $0xc8] sm:$0xff]
      %v426 = vld [vmem:[%s243 + $0xd0] sm:$0xff]
      %v427 = vld [vmem:[%s243 + $0xd8] sm:$0xff]
      %v428 = vld [vmem:[%s243 + $0xe0] sm:$0xff]
      %v429 = vld [vmem:[%s243 + $0xe8] sm:$0xff]
      %v430 = vld [vmem:[%s243 + $0xf0] sm:$0xff]
      %v431 = vld [vmem:[%s243 + $0xf8] sm:$0xff]
      %v432 = vld [vmem:[%s243 + $0x100] sm:$0xff]
      %v433 = vld [vmem:[%s243 + $0x108] sm:$0xff]
      %v434 = vld [vmem:[%s243 + $0x110] sm:$0xff]
      %v435 = vld [vmem:[%s243 + $0x118] sm:$0xff]
      %v436 = vld [vmem:[%s243 + $0x120] sm:$0xff]
      %v437 = vld [vmem:[%s243 + $0x128] sm:$0xff]
      %v438 = vld [vmem:[%s243 + $0x130] sm:$0xff]
      %v439 = vld [vmem:[%s243 + $0x138] sm:$0xff]
      %v440 = vld [vmem:[%s243 + $0x140] sm:$0xff]
      %v441 = vld [vmem:[%s243 + $0x148] sm:$0xff]
      %v442 = vld [vmem:[%s243 + $0x150] sm:$0xff]
      %v443 = vld [vmem:[%s243 + $0x158] sm:$0xff]
      %v444 = vld [vmem:[%s243 + $0x160] sm:$0xff]
      %v445 = vld [vmem:[%s243 + $0x168] sm:$0xff]
      %v446 = vld [vmem:[%s243 + $0x170] sm:$0xff]
      %v447 = vld [vmem:[%s243 + $0x178] sm:$0xff]
      %v448 = vld [vmem:[%s243 + $0x180] sm:$0xff]
      %v449 = vld [vmem:[%s243 + $0x188] sm:$0xff]
      %v450 = vld [vmem:[%s243 + $0x190] sm:$0xff]
      %v451 = vld [vmem:[%s243 + $0x198] sm:$0xff]
      %v452 = vld [vmem:[%s243 + $0x1a0] sm:$0xff]
      %v453 = vld [vmem:[%s243 + $0x1a8] sm:$0xff]
      %v454 = vld [vmem:[%s243 + $0x1b0] sm:$0xff]
      %v455 = vld [vmem:[%s243 + $0x1b8] sm:$0xff]
      %v456 = vld [vmem:[%s243 + $0x1c0] sm:$0xff]
      %v457 = vld [vmem:[%s243 + $0x1c8] sm:$0xff]
      %v458 = vld [vmem:[%s243 + $0x1d0] sm:$0xff]
      %v459 = vld [vmem:[%s243 + $0x1d8] sm:$0xff]
      %v460 = vld [vmem:[%s243 + $0x1e0] sm:$0xff]
      %v461 = vld [vmem:[%s243 + $0x1e8] sm:$0xff]
      %v462 = vld [vmem:[%s243 + $0x1f0] sm:$0xff]
      %v463 = vld [vmem:[%s243 + $0x1f8] sm:$0xff]
      %v464 = vld [vmem:[%s243 + $0x200] sm:$0xff]
      %v465 = vld [vmem:[%s243 + $0x208] sm:$0xff]
      %v466 = vld [vmem:[%s243 + $0x210] sm:$0xff]
      %v467 = vld [vmem:[%s243 + $0x218] sm:$0xff]
      %v468 = vld [vmem:[%s243 + $0x220] sm:$0xff]
      %v469 = vld [vmem:[%s243 + $0x228] sm:$0xff]
      %v470 = vld [vmem:[%s243 + $0x230] sm:$0xff]
      %v471 = vld [vmem:[%s243 + $0x238] sm:$0xff]
      %v472 = vld [vmem:[%s243 + $0x240] sm:$0xff]
      %v473 = vld [vmem:[%s243 + $0x248] sm:$0xff]
      %v474 = vld [vmem:[%s243 + $0x250] sm:$0xff]
      %v475 = vld [vmem:[%s243 + $0x258] sm:$0xff]
      %v476 = vld [vmem:[%s243 + $0x260] sm:$0xff]
      %v477 = vld [vmem:[%s243 + $0x268] sm:$0xff]
      %v478 = vld [vmem:[%s243 + $0x270] sm:$0xff]
      %v479 = vld [vmem:[%s243 + $0x278] sm:$0xff]
      %v480 = vld [vmem:[%s243 + $0x280] sm:$0xff]
      %v481 = vld [vmem:[%s243 + $0x288] sm:$0xff]
      %v482 = vld [vmem:[%s243 + $0x290] sm:$0xff]
      %v483 = vld [vmem:[%s243 + $0x298] sm:$0xff]
      %v484 = vld [vmem:[%s243 + $0x2a0] sm:$0xff]
      %v485 = vld [vmem:[%s243 + $0x2a8] sm:$0xff]
      %v486 = vld [vmem:[%s243 + $0x2b0] sm:$0xff]
      %v487 = vld [vmem:[%s243 + $0x2b8] sm:$0xff]
      %v488 = vld [vmem:[%s243 + $0x2c0] sm:$0xff]
      %v489 = vld [vmem:[%s243 + $0x2c8] sm:$0xff]
      %v490 = vld [vmem:[%s243 + $0x2d0] sm:$0xff]
      %v491 = vld [vmem:[%s243 + $0x2d8] sm:$0xff]
      %v492 = vld [vmem:[%s243 + $0x2e0] sm:$0xff]
      %v493 = vld [vmem:[%s243 + $0x2e8] sm:$0xff]
      %v494 = vld [vmem:[%s243 + $0x2f0] sm:$0xff]
      %v495 = vld [vmem:[%s243 + $0x2f8] sm:$0xff]
      %v496 = vld [vmem:[%s243 + $0x300] sm:$0xff]
      %v497 = vld [vmem:[%s243 + $0x308] sm:$0xff]
      %v498 = vld [vmem:[%s243 + $0x310] sm:$0xff]
      %v499 = vld [vmem:[%s243 + $0x318] sm:$0xff]
      %v500 = vld [vmem:[%s243 + $0x320] sm:$0xff]
      %v501 = vld [vmem:[%s243 + $0x328] sm:$0xff]
      %v502 = vld [vmem:[%s243 + $0x330] sm:$0xff]
      %v503 = vld [vmem:[%s243 + $0x338] sm:$0xff]
      %v504 = vld [vmem:[%s243 + $0x340] sm:$0xff]
      %v505 = vld [vmem:[%s243 + $0x348] sm:$0xff]
      %v506 = vld [vmem:[%s243 + $0x350] sm:$0xff]
      %v507 = vld [vmem:[%s243 + $0x358] sm:$0xff]
      %v508 = vld [vmem:[%s243 + $0x360] sm:$0xff]
      %v509 = vld [vmem:[%s243 + $0x368] sm:$0xff]
      %v510 = vld [vmem:[%s243 + $0x370] sm:$0xff]
      %v511 = vld [vmem:[%s243 + $0x378] sm:$0xff]
      %v512 = vld [vmem:[%s243 + $0x380] sm:$0xff]
      %v513 = vld [vmem:[%s243 + $0x388] sm:$0xff]
      %v514 = vld [vmem:[%s243 + $0x390] sm:$0xff]
      %v515 = vld [vmem:[%s243 + $0x398] sm:$0xff]
      %v516 = vld [vmem:[%s243 + $0x3a0] sm:$0xff]
      %v517 = vld [vmem:[%s243 + $0x3a8] sm:$0xff]
      %v518 = vld [vmem:[%s243 + $0x3b0] sm:$0xff]
      %v519 = vld [vmem:[%s243 + $0x3b8] sm:$0xff]
      %v520 = vld [vmem:[%s243 + $0x3c0] sm:$0xff]
      %v521 = vld [vmem:[%s243 + $0x3c8] sm:$0xff]
      %v522 = vld [vmem:[%s243 + $0x3d0] sm:$0xff]
      %v523 = vld [vmem:[%s243 + $0x3d8] sm:$0xff]
      %v524 = vld [vmem:[%s243 + $0x3e0] sm:$0xff]
      %v525 = vld [vmem:[%s243 + $0x3e8] sm:$0xff]
      %v526 = vld [vmem:[%s243 + $0x3f0] sm:$0xff]
      %v527 = vld [vmem:[%s243 + $0x3f8] sm:$0xff]
      %v528 = vld [vmem:[%s253] sm:$0xff]
      %v529 = vld [vmem:[%s253 + $0x8] sm:$0xff]
      %v530 = vld [vmem:[%s253 + $0x10] sm:$0xff]
      %v531 = vld [vmem:[%s253 + $0x18] sm:$0xff]
      %v532 = vld [vmem:[%s253 + $0x20] sm:$0xff]
      %v533 = vld [vmem:[%s253 + $0x28] sm:$0xff]
      %v534 = vld [vmem:[%s253 + $0x30] sm:$0xff]
      %v535 = vld [vmem:[%s253 + $0x38] sm:$0xff]
      %v536 = vld [vmem:[%s253 + $0x40] sm:$0xff]
      %v537 = vld [vmem:[%s253 + $0x48] sm:$0xff]
      %v538 = vld [vmem:[%s253 + $0x50] sm:$0xff]
      %v539 = vld [vmem:[%s253 + $0x58] sm:$0xff]
      %v540 = vld [vmem:[%s253 + $0x60] sm:$0xff]
      %v541 = vld [vmem:[%s253 + $0x68] sm:$0xff]
      %v542 = vld [vmem:[%s253 + $0x70] sm:$0xff]
      %v543 = vld [vmem:[%s253 + $0x78] sm:$0xff]
      %v544 = vld [vmem:[%s253 + $0x80] sm:$0xff]
      %v545 = vld [vmem:[%s253 + $0x88] sm:$0xff]
      %v546 = vld [vmem:[%s253 + $0x90] sm:$0x7]
      %vm547 = vcmask 154624
      %v549 = vsel %vm547, %v401, 0
      %v552 = vsel %vm547, %v403, 0
      %v555 = vsel %vm547, %v405, 0
      %v558 = vsel %vm547, %v407, 0
      %v561 = vsel %vm547, %v409, 0
      %v564 = vsel %vm547, %v411, 0
      %v567 = vsel %vm547, %v413, 0
      %v570 = vsel %vm547, %v415, 0
      %v573 = vsel %vm547, %v417, 0
      %v576 = vsel %vm547, %v419, 0
      %v579 = vsel %vm547, %v421, 0
      %v582 = vsel %vm547, %v423, 0
      %v585 = vsel %vm547, %v425, 0
      %v588 = vsel %vm547, %v427, 0
      %v591 = vsel %vm547, %v429, 0
      %v594 = vsel %vm547, %v431, 0
      %v597 = vsel %vm547, %v433, 0
      %v600 = vsel %vm547, %v435, 0
      %v603 = vsel %vm547, %v437, 0
      %v606 = vsel %vm547, %v439, 0
      %v609 = vsel %vm547, %v441, 0
      %v612 = vsel %vm547, %v443, 0
      %v615 = vsel %vm547, %v445, 0
      %v618 = vsel %vm547, %v447, 0
      %v621 = vsel %vm547, %v449, 0
      %v624 = vsel %vm547, %v451, 0
      %v627 = vsel %vm547, %v453, 0
      %v630 = vsel %vm547, %v455, 0
      %v633 = vsel %vm547, %v457, 0
      %v636 = vsel %vm547, %v459, 0
      %v639 = vsel %vm547, %v461, 0
      %v642 = vsel %vm547, %v463, 0
      %v645 = vsel %vm547, %v465, 0
      %v648 = vsel %vm547, %v467, 0
      %v651 = vsel %vm547, %v469, 0
      %v654 = vsel %vm547, %v471, 0
      %v657 = vsel %vm547, %v473, 0
      %v660 = vsel %vm547, %v475, 0
      %v663 = vsel %vm547, %v477, 0
      %v666 = vsel %vm547, %v479, 0
      %v669 = vsel %vm547, %v481, 0
      %v672 = vsel %vm547, %v483, 0
      %v675 = vsel %vm547, %v485, 0
      %v678 = vsel %vm547, %v487, 0
      %v681 = vsel %vm547, %v489, 0
      %v684 = vsel %vm547, %v491, 0
      %v687 = vsel %vm547, %v493, 0
      %v690 = vsel %vm547, %v495, 0
      %v693 = vsel %vm547, %v497, 0
      %v696 = vsel %vm547, %v499, 0
      %v699 = vsel %vm547, %v501, 0
      %v702 = vsel %vm547, %v503, 0
      %v705 = vsel %vm547, %v505, 0
      %v708 = vsel %vm547, %v507, 0
      %v711 = vsel %vm547, %v509, 0
      %v714 = vsel %vm547, %v511, 0
      %v717 = vsel %vm547, %v513, 0
      %v720 = vsel %vm547, %v515, 0
      %v723 = vsel %vm547, %v517, 0
      %v726 = vsel %vm547, %v519, 0
      %v729 = vsel %vm547, %v521, 0
      %v732 = vsel %vm547, %v523, 0
      %v735 = vsel %vm547, %v525, 0
      %v738 = vsel %vm547, %v527, 0
      %vm740 = vcmask 1042432
      %v742 = vsel %vm740, %v546, 0
      %744 = vmatprep.subr.mxu0 0.0
      %745 = vmatpush1.msra.mxu0 %v543
      %746 = vmatprep.subr.mxu0 0.0
      %747 = vmatpush1.msra.mxu0 %v542
      %748 = vmatprep.subr.mxu0 0.0
      %749 = vmatpush1.msra.mxu0 %v541
      %750 = vmatprep.subr.mxu0 0.0
      %751 = vmatpush1.msra.mxu0 %v540
      %752 = vmatprep.subr.mxu0 0.0
      %753 = vmatpush1.msra.mxu0 %v539
      %754 = vmatprep.subr.mxu0 0.0
      %755 = vmatpush1.msra.mxu0 %v538
      %756 = vmatprep.subr.mxu0 0.0
      %757 = vmatpush1.msra.mxu0 %v537
      %758 = vmatprep.subr.mxu0 0.0
      %759 = vmatpush1.msra.mxu0 %v536
      %760 = vmatprep.subr.mxu0 0.0
      %761 = vmatpush1.msra.mxu0 %v535
      %762 = vmatprep.subr.mxu0 0.0
      %763 = vmatpush1.msra.mxu0 %v534
      %764 = vmatprep.subr.mxu0 0.0
      %765 = vmatpush1.msra.mxu0 %v533
      %766 = vmatprep.subr.mxu0 0.0
      %767 = vmatpush1.msra.mxu0 %v532
      %768 = vmatprep.subr.mxu0 0.0
      %769 = vmatpush1.msra.mxu0 %v531
      %770 = vmatprep.subr.mxu0 0.0
      %771 = vmatpush1.msra.mxu0 %v530
      %772 = vmatprep.subr.mxu0 0.0
      %773 = vmatpush1.msra.mxu0 %v529
      %774 = vmatprep.subr.mxu0 0.0
      %775 = vmatpush1.msra.mxu0 %v528
      %776 = vmatprep.subr.mxu0 0.0
      %777 = vmatpush2.msra.mxu0 0.0
      %778 = vmatprep.subr.mxu0 0.0
      %779 = vmatpush2.msra.mxu0 0.0
      %780 = vmatprep.subr.mxu0 0.0
      %781 = vmatpush2.msra.mxu0 0.0
      %782 = vmatprep.subr.mxu0 0.0
      %783 = vmatpush2.msra.mxu0 0.0
      %784 = vmatprep.subr.mxu0 0.0
      %785 = vmatpush2.msra.mxu0 0.0
      %786 = vmatprep.subr.mxu0 0.0
      %787 = vmatpush2.msra.mxu0 0.0
      %788 = vmatprep.subr.mxu0 0.0
      %789 = vmatpush2.msra.mxu0 0.0
      %790 = vmatprep.subr.mxu0 0.0
      %791 = vmatpush2.msra.mxu0 0.0
      %792 = vmatprep.subr.mxu0 0.0
      %793 = vmatpush2.msra.mxu0 0.0
      %794 = vmatprep.subr.mxu0 0.0
      %795 = vmatpush2.msra.mxu0 0.0
      %796 = vmatprep.subr.mxu0 0.0
      %797 = vmatpush2.msra.mxu0 0.0
      %798 = vmatprep.subr.mxu0 0.0
      %799 = vmatpush2.msra.mxu0 0.0
      %800 = vmatprep.subr.mxu0 0.0
      %801 = vmatpush2.msra.mxu0 0.0
      %802 = vmatprep.subr.mxu0 0.0
      %803 = vmatpush2.msra.mxu0 %v742
      %804 = vmatprep.subr.mxu0 0.0
      %805 = vmatpush2.msra.mxu0 %v545
      %806 = vmatprep.subr.mxu0 0.0
      %807 = vmatpush2.msra.mxu0 %v544
      %808 = vmatprep.mubr.f32.mxu0 %v549
      %809 = vmatmul.mubr.f32.gmra.mxu0 %v400
      %v810 = vpop.f32.mrf.mxu0
      %v811 = vadd.f32 0.0, %v810
      %v812 = vpop.f32.mrf.mxu0
      %813 = vmatprep.mubr.f32.mxu0 %v552
      %814 = vmatmul.mubr.f32.gmra.mxu0 %v402
      %v815 = vpop.f32.mrf.mxu0
      %v816 = vadd.f32 0.0, %v815
      %v817 = vpop.f32.mrf.mxu0
      %818 = vmatprep.mubr.f32.mxu0 %v555
      %819 = vmatmul.mubr.f32.gmra.mxu0 %v404
      %v820 = vpop.f32.mrf.mxu0
      %v821 = vadd.f32 0.0, %v820
      %v822 = vpop.f32.mrf.mxu0
      %823 = vmatprep.mubr.f32.mxu0 %v558
      %824 = vmatmul.mubr.f32.gmra.mxu0 %v406
      %v825 = vpop.f32.mrf.mxu0
      %v826 = vadd.f32 0.0, %v825
      %v827 = vpop.f32.mrf.mxu0
      %828 = vmatprep.mubr.f32.mxu0 %v561
      %829 = vmatmul.mubr.f32.gmra.mxu0 %v408
      %v830 = vpop.f32.mrf.mxu0
      %v831 = vadd.f32 0.0, %v830
      %v832 = vpop.f32.mrf.mxu0
      %833 = vmatprep.mubr.f32.mxu0 %v564
      %834 = vmatmul.mubr.f32.gmra.mxu0 %v410
      %v835 = vpop.f32.mrf.mxu0
      %v836 = vadd.f32 0.0, %v835
      %v837 = vpop.f32.mrf.mxu0
      %838 = vmatprep.mubr.f32.mxu0 %v567
      %839 = vmatmul.mubr.f32.gmra.mxu0 %v412
      %v840 = vpop.f32.mrf.mxu0
      %v841 = vadd.f32 0.0, %v840
      %v842 = vpop.f32.mrf.mxu0
      %843 = vmatprep.mubr.f32.mxu0 %v570
      %844 = vmatmul.mubr.f32.gmra.mxu0 %v414
      %v845 = vpop.f32.mrf.mxu0
      %v846 = vadd.f32 0.0, %v845
      %v847 = vpop.f32.mrf.mxu0
      %848 = vmatprep.mubr.f32.mxu0 %v573
      %849 = vmatmul.mubr.f32.gmra.mxu0 %v416
      %v850 = vpop.f32.mrf.mxu0
      %v851 = vadd.f32 0.0, %v850
      %v852 = vpop.f32.mrf.mxu0
      %853 = vmatprep.mubr.f32.mxu0 %v576
      %854 = vmatmul.mubr.f32.gmra.mxu0 %v418
      %v855 = vpop.f32.mrf.mxu0
      %v856 = vadd.f32 0.0, %v855
      %v857 = vpop.f32.mrf.mxu0
      %858 = vmatprep.mubr.f32.mxu0 %v579
      %859 = vmatmul.mubr.f32.gmra.mxu0 %v420
      %v860 = vpop.f32.mrf.mxu0
      %v861 = vadd.f32 0.0, %v860
      %v862 = vpop.f32.mrf.mxu0
      %863 = vmatprep.mubr.f32.mxu0 %v582
      %864 = vmatmul.mubr.f32.gmra.mxu0 %v422
      %v865 = vpop.f32.mrf.mxu0
      %v866 = vadd.f32 0.0, %v865
      %v867 = vpop.f32.mrf.mxu0
      %868 = vmatprep.mubr.f32.mxu0 %v585
      %869 = vmatmul.mubr.f32.gmra.mxu0 %v424
      %v870 = vpop.f32.mrf.mxu0
      %v871 = vadd.f32 0.0, %v870
      %v872 = vpop.f32.mrf.mxu0
      %873 = vmatprep.mubr.f32.mxu0 %v588
      %874 = vmatmul.mubr.f32.gmra.mxu0 %v426
      %v875 = vpop.f32.mrf.mxu0
      %v876 = vadd.f32 0.0, %v875
      %v877 = vpop.f32.mrf.mxu0
      %878 = vmatprep.mubr.f32.mxu0 %v591
      %879 = vmatmul.mubr.f32.gmra.mxu0 %v428
      %v880 = vpop.f32.mrf.mxu0
      %v881 = vadd.f32 0.0, %v880
      %v882 = vpop.f32.mrf.mxu0
      %883 = vmatprep.mubr.f32.mxu0 %v594
      %884 = vmatmul.mubr.f32.gmra.mxu0 %v430
      %v885 = vpop.f32.mrf.mxu0
      %v886 = vadd.f32 0.0, %v885
      %v887 = vpop.f32.mrf.mxu0
      %888 = vmatprep.mubr.f32.mxu0 %v597
      %889 = vmatmul.mubr.f32.gmra.mxu0 %v432
      %v890 = vpop.f32.mrf.mxu0
      %v891 = vadd.f32 0.0, %v890
      %v892 = vpop.f32.mrf.mxu0
      %893 = vmatprep.mubr.f32.mxu0 %v600
      %894 = vmatmul.mubr.f32.gmra.mxu0 %v434
      %v895 = vpop.f32.mrf.mxu0
      %v896 = vadd.f32 0.0, %v895
      %v897 = vpop.f32.mrf.mxu0
      %898 = vmatprep.mubr.f32.mxu0 %v603
      %899 = vmatmul.mubr.f32.gmra.mxu0 %v436
      %v900 = vpop.f32.mrf.mxu0
      %v901 = vadd.f32 0.0, %v900
      %v902 = vpop.f32.mrf.mxu0
      %903 = vmatprep.mubr.f32.mxu0 %v606
      %904 = vmatmul.mubr.f32.gmra.mxu0 %v438
      %v905 = vpop.f32.mrf.mxu0
      %v906 = vadd.f32 0.0, %v905
      %v907 = vpop.f32.mrf.mxu0
      %908 = vmatprep.mubr.f32.mxu0 %v609
      %909 = vmatmul.mubr.f32.gmra.mxu0 %v440
      %v910 = vpop.f32.mrf.mxu0
      %v911 = vadd.f32 0.0, %v910
      %v912 = vpop.f32.mrf.mxu0
      %913 = vmatprep.mubr.f32.mxu0 %v612
      %914 = vmatmul.mubr.f32.gmra.mxu0 %v442
      %v915 = vpop.f32.mrf.mxu0
      %v916 = vadd.f32 0.0, %v915
      %v917 = vpop.f32.mrf.mxu0
      %918 = vmatprep.mubr.f32.mxu0 %v615
      %919 = vmatmul.mubr.f32.gmra.mxu0 %v444
      %v920 = vpop.f32.mrf.mxu0
      %v921 = vadd.f32 0.0, %v920
      %v922 = vpop.f32.mrf.mxu0
      %923 = vmatprep.mubr.f32.mxu0 %v618
      %924 = vmatmul.mubr.f32.gmra.mxu0 %v446
      %v925 = vpop.f32.mrf.mxu0
      %v926 = vadd.f32 0.0, %v925
      %v927 = vpop.f32.mrf.mxu0
      %928 = vmatprep.mubr.f32.mxu0 %v621
      %929 = vmatmul.mubr.f32.gmra.mxu0 %v448
      %v930 = vpop.f32.mrf.mxu0
      %v931 = vadd.f32 0.0, %v930
      %v932 = vpop.f32.mrf.mxu0
      %933 = vmatprep.mubr.f32.mxu0 %v624
      %934 = vmatmul.mubr.f32.gmra.mxu0 %v450
      %v935 = vpop.f32.mrf.mxu0
      %v936 = vadd.f32 0.0, %v935
      %v937 = vpop.f32.mrf.mxu0
      %938 = vmatprep.mubr.f32.mxu0 %v627
      %939 = vmatmul.mubr.f32.gmra.mxu0 %v452
      %v940 = vpop.f32.mrf.mxu0
      %v941 = vadd.f32 0.0, %v940
      %v942 = vpop.f32.mrf.mxu0
      %943 = vmatprep.mubr.f32.mxu0 %v630
      %944 = vmatmul.mubr.f32.gmra.mxu0 %v454
      %v945 = vpop.f32.mrf.mxu0
      %v946 = vadd.f32 0.0, %v945
      %v947 = vpop.f32.mrf.mxu0
      %948 = vmatprep.mubr.f32.mxu0 %v633
      %949 = vmatmul.mubr.f32.gmra.mxu0 %v456
      %v950 = vpop.f32.mrf.mxu0
      %v951 = vadd.f32 0.0, %v950
      %v952 = vpop.f32.mrf.mxu0
      %953 = vmatprep.mubr.f32.mxu0 %v636
      %954 = vmatmul.mubr.f32.gmra.mxu0 %v458
      %v955 = vpop.f32.mrf.mxu0
      %v956 = vadd.f32 0.0, %v955
      %v957 = vpop.f32.mrf.mxu0
      %958 = vmatprep.mubr.f32.mxu0 %v639
      %959 = vmatmul.mubr.f32.gmra.mxu0 %v460
      %v960 = vpop.f32.mrf.mxu0
      %v961 = vadd.f32 0.0, %v960
      %v962 = vpop.f32.mrf.mxu0
      %963 = vmatprep.mubr.f32.mxu0 %v642
      %964 = vmatmul.mubr.f32.gmra.mxu0 %v462
      %v965 = vpop.f32.mrf.mxu0
      %v966 = vadd.f32 0.0, %v965
      %v967 = vpop.f32.mrf.mxu0
      %968 = vmatprep.mubr.f32.mxu0 %v645
      %969 = vmatmul.mubr.f32.gmra.mxu0 %v464
      %v970 = vpop.f32.mrf.mxu0
      %v971 = vadd.f32 0.0, %v970
      %v972 = vpop.f32.mrf.mxu0
      %973 = vmatprep.mubr.f32.mxu0 %v648
      %974 = vmatmul.mubr.f32.gmra.mxu0 %v466
      %v975 = vpop.f32.mrf.mxu0
      %v976 = vadd.f32 0.0, %v975
      %v977 = vpop.f32.mrf.mxu0
      %978 = vmatprep.mubr.f32.mxu0 %v651
      %979 = vmatmul.mubr.f32.gmra.mxu0 %v468
      %v980 = vpop.f32.mrf.mxu0
      %v981 = vadd.f32 0.0, %v980
      %v982 = vpop.f32.mrf.mxu0
      %983 = vmatprep.mubr.f32.mxu0 %v654
      %984 = vmatmul.mubr.f32.gmra.mxu0 %v470
      %v985 = vpop.f32.mrf.mxu0
      %v986 = vadd.f32 0.0, %v985
      %v987 = vpop.f32.mrf.mxu0
      %988 = vmatprep.mubr.f32.mxu0 %v657
      %989 = vmatmul.mubr.f32.gmra.mxu0 %v472
      %v990 = vpop.f32.mrf.mxu0
      %v991 = vadd.f32 0.0, %v990
      %v992 = vpop.f32.mrf.mxu0
      %993 = vmatprep.mubr.f32.mxu0 %v660
      %994 = vmatmul.mubr.f32.gmra.mxu0 %v474
      %v995 = vpop.f32.mrf.mxu0
      %v996 = vadd.f32 0.0, %v995
      %v997 = vpop.f32.mrf.mxu0
      %998 = vmatprep.mubr.f32.mxu0 %v663
      %999 = vmatmul.mubr.f32.gmra.mxu0 %v476
      %v1000 = vpop.f32.mrf.mxu0
      %v1001 = vadd.f32 0.0, %v1000
      %v1002 = vpop.f32.mrf.mxu0
      %1003 = vmatprep.mubr.f32.mxu0 %v666
      %1004 = vmatmul.mubr.f32.gmra.mxu0 %v478
      %v1005 = vpop.f32.mrf.mxu0
      %v1006 = vadd.f32 0.0, %v1005
      %v1007 = vpop.f32.mrf.mxu0
      %1008 = vmatprep.mubr.f32.mxu0 %v669
      %1009 = vmatmul.mubr.f32.gmra.mxu0 %v480
      %v1010 = vpop.f32.mrf.mxu0
      %v1011 = vadd.f32 0.0, %v1010
      %v1012 = vpop.f32.mrf.mxu0
      %1013 = vmatprep.mubr.f32.mxu0 %v672
      %1014 = vmatmul.mubr.f32.gmra.mxu0 %v482
      %v1015 = vpop.f32.mrf.mxu0
      %v1016 = vadd.f32 0.0, %v1015
      %v1017 = vpop.f32.mrf.mxu0
      %1018 = vmatprep.mubr.f32.mxu0 %v675
      %1019 = vmatmul.mubr.f32.gmra.mxu0 %v484
      %v1020 = vpop.f32.mrf.mxu0
      %v1021 = vadd.f32 0.0, %v1020
      %v1022 = vpop.f32.mrf.mxu0
      %1023 = vmatprep.mubr.f32.mxu0 %v678
      %1024 = vmatmul.mubr.f32.gmra.mxu0 %v486
      %v1025 = vpop.f32.mrf.mxu0
      %v1026 = vadd.f32 0.0, %v1025
      %v1027 = vpop.f32.mrf.mxu0
      %1028 = vmatprep.mubr.f32.mxu0 %v681
      %1029 = vmatmul.mubr.f32.gmra.mxu0 %v488
      %v1030 = vpop.f32.mrf.mxu0
      %v1031 = vadd.f32 0.0, %v1030
      %v1032 = vpop.f32.mrf.mxu0
      %1033 = vmatprep.mubr.f32.mxu0 %v684
      %1034 = vmatmul.mubr.f32.gmra.mxu0 %v490
      %v1035 = vpop.f32.mrf.mxu0
      %v1036 = vadd.f32 0.0, %v1035
      %v1037 = vpop.f32.mrf.mxu0
      %1038 = vmatprep.mubr.f32.mxu0 %v687
      %1039 = vmatmul.mubr.f32.gmra.mxu0 %v492
      %v1040 = vpop.f32.mrf.mxu0
      %v1041 = vadd.f32 0.0, %v1040
      %v1042 = vpop.f32.mrf.mxu0
      %1043 = vmatprep.mubr.f32.mxu0 %v690
      %1044 = vmatmul.mubr.f32.gmra.mxu0 %v494
      %v1045 = vpop.f32.mrf.mxu0
      %v1046 = vadd.f32 0.0, %v1045
      %v1047 = vpop.f32.mrf.mxu0
      %1048 = vmatprep.mubr.f32.mxu0 %v693
      %1049 = vmatmul.mubr.f32.gmra.mxu0 %v496
      %v1050 = vpop.f32.mrf.mxu0
      %v1051 = vadd.f32 0.0, %v1050
      %v1052 = vpop.f32.mrf.mxu0
      %1053 = vmatprep.mubr.f32.mxu0 %v696
      %1054 = vmatmul.mubr.f32.gmra.mxu0 %v498
      %v1055 = vpop.f32.mrf.mxu0
      %v1056 = vadd.f32 0.0, %v1055
      %v1057 = vpop.f32.mrf.mxu0
      %1058 = vmatprep.mubr.f32.mxu0 %v699
      %1059 = vmatmul.mubr.f32.gmra.mxu0 %v500
      %v1060 = vpop.f32.mrf.mxu0
      %v1061 = vadd.f32 0.0, %v1060
      %v1062 = vpop.f32.mrf.mxu0
      %1063 = vmatprep.mubr.f32.mxu0 %v702
      %1064 = vmatmul.mubr.f32.gmra.mxu0 %v502
      %v1065 = vpop.f32.mrf.mxu0
      %v1066 = vadd.f32 0.0, %v1065
      %v1067 = vpop.f32.mrf.mxu0
      %1068 = vmatprep.mubr.f32.mxu0 %v705
      %1069 = vmatmul.mubr.f32.gmra.mxu0 %v504
      %v1070 = vpop.f32.mrf.mxu0
      %v1071 = vadd.f32 0.0, %v1070
      %v1072 = vpop.f32.mrf.mxu0
      %1073 = vmatprep.mubr.f32.mxu0 %v708
      %1074 = vmatmul.mubr.f32.gmra.mxu0 %v506
      %v1075 = vpop.f32.mrf.mxu0
      %v1076 = vadd.f32 0.0, %v1075
      %v1077 = vpop.f32.mrf.mxu0
      %1078 = vmatprep.mubr.f32.mxu0 %v711
      %1079 = vmatmul.mubr.f32.gmra.mxu0 %v508
      %v1080 = vpop.f32.mrf.mxu0
      %v1081 = vadd.f32 0.0, %v1080
      %v1082 = vpop.f32.mrf.mxu0
      %1083 = vmatprep.mubr.f32.mxu0 %v714
      %1084 = vmatmul.mubr.f32.gmra.mxu0 %v510
      %v1085 = vpop.f32.mrf.mxu0
      %v1086 = vadd.f32 0.0, %v1085
      %v1087 = vpop.f32.mrf.mxu0
      %1088 = vmatprep.mubr.f32.mxu0 %v717
      %1089 = vmatmul.mubr.f32.gmra.mxu0 %v512
      %v1090 = vpop.f32.mrf.mxu0
      %v1091 = vadd.f32 0.0, %v1090
      %v1092 = vpop.f32.mrf.mxu0
      %1093 = vmatprep.mubr.f32.mxu0 %v720
      %1094 = vmatmul.mubr.f32.gmra.mxu0 %v514
      %v1095 = vpop.f32.mrf.mxu0
      %v1096 = vadd.f32 0.0, %v1095
      %v1097 = vpop.f32.mrf.mxu0
      %1098 = vmatprep.mubr.f32.mxu0 %v723
      %1099 = vmatmul.mubr.f32.gmra.mxu0 %v516
      %v1100 = vpop.f32.mrf.mxu0
      %v1101 = vadd.f32 0.0, %v1100
      %v1102 = vpop.f32.mrf.mxu0
      %1103 = vmatprep.mubr.f32.mxu0 %v726
      %1104 = vmatmul.mubr.f32.gmra.mxu0 %v518
      %v1105 = vpop.f32.mrf.mxu0
      %v1106 = vadd.f32 0.0, %v1105
      %v1107 = vpop.f32.mrf.mxu0
      %1108 = vmatprep.mubr.f32.mxu0 %v729
      %1109 = vmatmul.mubr.f32.gmra.mxu0 %v520
      %v1110 = vpop.f32.mrf.mxu0
      %v1111 = vadd.f32 0.0, %v1110
      %v1112 = vpop.f32.mrf.mxu0
      %1113 = vmatprep.mubr.f32.mxu0 %v732
      %1114 = vmatmul.mubr.f32.gmra.mxu0 %v522
      %v1115 = vpop.f32.mrf.mxu0
      %v1116 = vadd.f32 0.0, %v1115
      %v1117 = vpop.f32.mrf.mxu0
      %1118 = vmatprep.mubr.f32.mxu0 %v735
      %1119 = vmatmul.mubr.f32.gmra.mxu0 %v524
      %v1120 = vpop.f32.mrf.mxu0
      %v1121 = vadd.f32 0.0, %v1120
      %v1122 = vpop.f32.mrf.mxu0
      %1123 = vmatprep.mubr.f32.mxu0 %v738
      %1124 = vmatmul.mubr.f32.gmra.mxu0 %v526
      %v1125 = vpop.f32.mrf.mxu0
      %v1126 = vadd.f32 0.0, %v1125
      %v1127 = vpop.f32.mrf.mxu0
      %1128 = vdwg.mxu0
      %v1129 = vadd.f32 %v336, %v811
      %v1130 = vadd.f32 %v337, %v816
      %v1131 = vadd.f32 %v338, %v821
      %v1132 = vadd.f32 %v339, %v826
      %v1133 = vadd.f32 %v340, %v831
      %v1134 = vadd.f32 %v341, %v836
      %v1135 = vadd.f32 %v342, %v841
      %v1136 = vadd.f32 %v343, %v846
      %v1137 = vadd.f32 %v344, %v851
      %v1138 = vadd.f32 %v345, %v856
      %v1139 = vadd.f32 %v346, %v861
      %v1140 = vadd.f32 %v347, %v866
      %v1141 = vadd.f32 %v348, %v871
      %v1142 = vadd.f32 %v349, %v876
      %v1143 = vadd.f32 %v350, %v881
      %v1144 = vadd.f32 %v351, %v886
      %v1145 = vadd.f32 %v352, %v891
      %v1146 = vadd.f32 %v353, %v896
      %v1147 = vadd.f32 %v354, %v901
      %v1148 = vadd.f32 %v355, %v906
      %v1149 = vadd.f32 %v356, %v911
      %v1150 = vadd.f32 %v357, %v916
      %v1151 = vadd.f32 %v358, %v921
      %v1152 = vadd.f32 %v359, %v926
      %v1153 = vadd.f32 %v360, %v931
      %v1154 = vadd.f32 %v361, %v936
      %v1155 = vadd.f32 %v362, %v941
      %v1156 = vadd.f32 %v363, %v946
      %v1157 = vadd.f32 %v364, %v951
      %v1158 = vadd.f32 %v365, %v956
      %v1159 = vadd.f32 %v366, %v961
      %v1160 = vadd.f32 %v367, %v966
      %v1161 = vadd.f32 %v368, %v971
      %v1162 = vadd.f32 %v369, %v976
      %v1163 = vadd.f32 %v370, %v981
      %v1164 = vadd.f32 %v371, %v986
      %v1165 = vadd.f32 %v372, %v991
      %v1166 = vadd.f32 %v373, %v996
      %v1167 = vadd.f32 %v374, %v1001
      %v1168 = vadd.f32 %v375, %v1006
      %v1169 = vadd.f32 %v376, %v1011
      %v1170 = vadd.f32 %v377, %v1016
      %v1171 = vadd.f32 %v378, %v1021
      %v1172 = vadd.f32 %v379, %v1026
      %v1173 = vadd.f32 %v380, %v1031
      %v1174 = vadd.f32 %v381, %v1036
      %v1175 = vadd.f32 %v382, %v1041
      %v1176 = vadd.f32 %v383, %v1046
      %v1177 = vadd.f32 %v384, %v1051
      %v1178 = vadd.f32 %v385, %v1056
      %v1179 = vadd.f32 %v386, %v1061
      %v1180 = vadd.f32 %v387, %v1066
      %v1181 = vadd.f32 %v388, %v1071
      %v1182 = vadd.f32 %v389, %v1076
      %v1183 = vadd.f32 %v390, %v1081
      %v1184 = vadd.f32 %v391, %v1086
      %v1185 = vadd.f32 %v392, %v1091
      %v1186 = vadd.f32 %v393, %v1096
      %v1187 = vadd.f32 %v394, %v1101
      %v1188 = vadd.f32 %v395, %v1106
      %v1189 = vadd.f32 %v396, %v1111
      %v1190 = vadd.f32 %v397, %v1116
      %v1191 = vadd.f32 %v398, %v1121
      %v1192 = vadd.f32 %v399, %v1126
      %vm1193 = vcmask 523264
      %1194 = vst.msk [vmem:[#allocation2] sm:$0xff] %vm1193, %v1129
      %1195 = vst.msk [vmem:[#allocation2 + $0x8] sm:$0xff] %vm1193, %v1130
      %1196 = vst.msk [vmem:[#allocation2 + $0x10] sm:$0xff] %vm1193, %v1131
      %1197 = vst.msk [vmem:[#allocation2 + $0x18] sm:$0xff] %vm1193, %v1132
      %1198 = vst.msk [vmem:[#allocation2 + $0x20] sm:$0xff] %vm1193, %v1133
      %1199 = vst.msk [vmem:[#allocation2 + $0x28] sm:$0xff] %vm1193, %v1134
      %1200 = vst.msk [vmem:[#allocation2 + $0x30] sm:$0xff] %vm1193, %v1135
      %1201 = vst.msk [vmem:[#allocation2 + $0x38] sm:$0xff] %vm1193, %v1136
      %1202 = vst.msk [vmem:[#allocation2 + $0x40] sm:$0xff] %vm1193, %v1137
      %1203 = vst.msk [vmem:[#allocation2 + $0x48] sm:$0xff] %vm1193, %v1138
      %1204 = vst.msk [vmem:[#allocation2 + $0x50] sm:$0xff] %vm1193, %v1139
      %1205 = vst.msk [vmem:[#allocation2 + $0x58] sm:$0xff] %vm1193, %v1140
      %1206 = vst.msk [vmem:[#allocation2 + $0x60] sm:$0xff] %vm1193, %v1141
      %1207 = vst.msk [vmem:[#allocation2 + $0x68] sm:$0xff] %vm1193, %v1142
      %1208 = vst.msk [vmem:[#allocation2 + $0x70] sm:$0xff] %vm1193, %v1143
      %1209 = vst.msk [vmem:[#allocation2 + $0x78] sm:$0xff] %vm1193, %v1144
      %1210 = vst.msk [vmem:[#allocation2 + $0x80] sm:$0xff] %vm1193, %v1145
      %1211 = vst.msk [vmem:[#allocation2 + $0x88] sm:$0xff] %vm1193, %v1146
      %1212 = vst.msk [vmem:[#allocation2 + $0x90] sm:$0xff] %vm1193, %v1147
      %1213 = vst.msk [vmem:[#allocation2 + $0x98] sm:$0xff] %vm1193, %v1148
      %1214 = vst.msk [vmem:[#allocation2 + $0xa0] sm:$0xff] %vm1193, %v1149
      %1215 = vst.msk [vmem:[#allocation2 + $0xa8] sm:$0xff] %vm1193, %v1150
      %1216 = vst.msk [vmem:[#allocation2 + $0xb0] sm:$0xff] %vm1193, %v1151
      %1217 = vst.msk [vmem:[#allocation2 + $0xb8] sm:$0xff] %vm1193, %v1152
      %1218 = vst.msk [vmem:[#allocation2 + $0xc0] sm:$0xff] %vm1193, %v1153
      %1219 = vst.msk [vmem:[#allocation2 + $0xc8] sm:$0xff] %vm1193, %v1154
      %1220 = vst.msk [vmem:[#allocation2 + $0xd0] sm:$0xff] %vm1193, %v1155
      %1221 = vst.msk [vmem:[#allocation2 + $0xd8] sm:$0xff] %vm1193, %v1156
      %1222 = vst.msk [vmem:[#allocation2 + $0xe0] sm:$0xff] %vm1193, %v1157
      %1223 = vst.msk [vmem:[#allocation2 + $0xe8] sm:$0xff] %vm1193, %v1158
      %1224 = vst.msk [vmem:[#allocation2 + $0xf0] sm:$0xff] %vm1193, %v1159
      %1225 = vst.msk [vmem:[#allocation2 + $0xf8] sm:$0xff] %vm1193, %v1160
      %1226 = vst.msk [vmem:[#allocation2 + $0x100] sm:$0xff] %vm1193, %v1161
      %1227 = vst.msk [vmem:[#allocation2 + $0x108] sm:$0xff] %vm1193, %v1162
      %1228 = vst.msk [vmem:[#allocation2 + $0x110] sm:$0xff] %vm1193, %v1163
      %1229 = vst.msk [vmem:[#allocation2 + $0x118] sm:$0xff] %vm1193, %v1164
      %1230 = vst.msk [vmem:[#allocation2 + $0x120] sm:$0xff] %vm1193, %v1165
      %1231 = vst.msk [vmem:[#allocation2 + $0x128] sm:$0xff] %vm1193, %v1166
      %1232 = vst.msk [vmem:[#allocation2 + $0x130] sm:$0xff] %vm1193, %v1167
      %1233 = vst.msk [vmem:[#allocation2 + $0x138] sm:$0xff] %vm1193, %v1168
      %1234 = vst.msk [vmem:[#allocation2 + $0x140] sm:$0xff] %vm1193, %v1169
      %1235 = vst.msk [vmem:[#allocation2 + $0x148] sm:$0xff] %vm1193, %v1170
      %1236 = vst.msk [vmem:[#allocation2 + $0x150] sm:$0xff] %vm1193, %v1171
      %1237 = vst.msk [vmem:[#allocation2 + $0x158] sm:$0xff] %vm1193, %v1172
      %1238 = vst.msk [vmem:[#allocation2 + $0x160] sm:$0xff] %vm1193, %v1173
      %1239 = vst.msk [vmem:[#allocation2 + $0x168] sm:$0xff] %vm1193, %v1174
      %1240 = vst.msk [vmem:[#allocation2 + $0x170] sm:$0xff] %vm1193, %v1175
      %1241 = vst.msk [vmem:[#allocation2 + $0x178] sm:$0xff] %vm1193, %v1176
      %1242 = vst.msk [vmem:[#allocation2 + $0x180] sm:$0xff] %vm1193, %v1177
      %1243 = vst.msk [vmem:[#allocation2 + $0x188] sm:$0xff] %vm1193, %v1178
      %1244 = vst.msk [vmem:[#allocation2 + $0x190] sm:$0xff] %vm1193, %v1179
      %1245 = vst.msk [vmem:[#allocation2 + $0x198] sm:$0xff] %vm1193, %v1180
      %1246 = vst.msk [vmem:[#allocation2 + $0x1a0] sm:$0xff] %vm1193, %v1181
      %1247 = vst.msk [vmem:[#allocation2 + $0x1a8] sm:$0xff] %vm1193, %v1182
      %1248 = vst.msk [vmem:[#allocation2 + $0x1b0] sm:$0xff] %vm1193, %v1183
      %1249 = vst.msk [vmem:[#allocation2 + $0x1b8] sm:$0xff] %vm1193, %v1184
      %1250 = vst.msk [vmem:[#allocation2 + $0x1c0] sm:$0xff] %vm1193, %v1185
      %1251 = vst.msk [vmem:[#allocation2 + $0x1c8] sm:$0xff] %vm1193, %v1186
      %1252 = vst.msk [vmem:[#allocation2 + $0x1d0] sm:$0xff] %vm1193, %v1187
      %1253 = vst.msk [vmem:[#allocation2 + $0x1d8] sm:$0xff] %vm1193, %v1188
      %1254 = vst.msk [vmem:[#allocation2 + $0x1e0] sm:$0xff] %vm1193, %v1189
      %1255 = vst.msk [vmem:[#allocation2 + $0x1e8] sm:$0xff] %vm1193, %v1190
      %1256 = vst.msk [vmem:[#allocation2 + $0x1f0] sm:$0xff] %vm1193, %v1191
      %1257 = vst.msk [vmem:[#allocation2 + $0x1f8] sm:$0xff] %vm1193, %v1192
      // Predicated region
      $region37: #{tpu_custom_call.1} parent=31 // pred_check
        %p1258 = pneg %p267
      $region38: #{tpu_custom_call.1} parent=31 // pred_check_branch
        %1260 = sbr.rel (%p1258) target = $region40
      $region39: #{tpu_custom_call.1} parent=31 // pred_region
        %v1261 = vld [vmem:[#allocation2] sm:$0xff]
        %v1262 = vld [vmem:[#allocation2 + $0x8] sm:$0xff]
        %v1263 = vld [vmem:[#allocation2 + $0x10] sm:$0xff]
        %v1264 = vld [vmem:[#allocation2 + $0x18] sm:$0xff]
        %v1265 = vld [vmem:[#allocation2 + $0x20] sm:$0xff]
        %v1266 = vld [vmem:[#allocation2 + $0x28] sm:$0xff]
        %v1267 = vld [vmem:[#allocation2 + $0x30] sm:$0xff]
        %v1268 = vld [vmem:[#allocation2 + $0x38] sm:$0xff]
        %v1269 = vld [vmem:[#allocation2 + $0x40] sm:$0xff]
        %v1270 = vld [vmem:[#allocation2 + $0x48] sm:$0xff]
        %v1271 = vld [vmem:[#allocation2 + $0x50] sm:$0xff]
        %v1272 = vld [vmem:[#allocation2 + $0x58] sm:$0xff]
        %v1273 = vld [vmem:[#allocation2 + $0x60] sm:$0xff]
        %v1274 = vld [vmem:[#allocation2 + $0x68] sm:$0xff]
        %v1275 = vld [vmem:[#allocation2 + $0x70] sm:$0xff]
        %v1276 = vld [vmem:[#allocation2 + $0x78] sm:$0xff]
        %v1277 = vld [vmem:[#allocation2 + $0x80] sm:$0xff]
        %v1278 = vld [vmem:[#allocation2 + $0x88] sm:$0xff]
        %v1279 = vld [vmem:[#allocation2 + $0x90] sm:$0xff]
        %v1280 = vld [vmem:[#allocation2 + $0x98] sm:$0xff]
        %v1281 = vld [vmem:[#allocation2 + $0xa0] sm:$0xff]
        %v1282 = vld [vmem:[#allocation2 + $0xa8] sm:$0xff]
        %v1283 = vld [vmem:[#allocation2 + $0xb0] sm:$0xff]
        %v1284 = vld [vmem:[#allocation2 + $0xb8] sm:$0xff]
        %v1285 = vld [vmem:[#allocation2 + $0xc0] sm:$0xff]
        %v1286 = vld [vmem:[#allocation2 + $0xc8] sm:$0xff]
        %v1287 = vld [vmem:[#allocation2 + $0xd0] sm:$0xff]
        %v1288 = vld [vmem:[#allocation2 + $0xd8] sm:$0xff]
        %v1289 = vld [vmem:[#allocation2 + $0xe0] sm:$0xff]
        %v1290 = vld [vmem:[#allocation2 + $0xe8] sm:$0xff]
        %v1291 = vld [vmem:[#allocation2 + $0xf0] sm:$0xff]
        %v1292 = vld [vmem:[#allocation2 + $0xf8] sm:$0xff]
        %v1293 = vld [vmem:[#allocation2 + $0x100] sm:$0xff]
        %v1294 = vld [vmem:[#allocation2 + $0x108] sm:$0xff]
        %v1295 = vld [vmem:[#allocation2 + $0x110] sm:$0xff]
        %v1296 = vld [vmem:[#allocation2 + $0x118] sm:$0xff]
        %v1297 = vld [vmem:[#allocation2 + $0x120] sm:$0xff]
        %v1298 = vld [vmem:[#allocation2 + $0x128] sm:$0xff]
        %v1299 = vld [vmem:[#allocation2 + $0x130] sm:$0xff]
        %v1300 = vld [vmem:[#allocation2 + $0x138] sm:$0xff]
        %v1301 = vld [vmem:[#allocation2 + $0x140] sm:$0xff]
        %v1302 = vld [vmem:[#allocation2 + $0x148] sm:$0xff]
        %v1303 = vld [vmem:[#allocation2 + $0x150] sm:$0xff]
        %v1304 = vld [vmem:[#allocation2 + $0x158] sm:$0xff]
        %v1305 = vld [vmem:[#allocation2 + $0x160] sm:$0xff]
        %v1306 = vld [vmem:[#allocation2 + $0x168] sm:$0xff]
        %v1307 = vld [vmem:[#allocation2 + $0x170] sm:$0xff]
        %v1308 = vld [vmem:[#allocation2 + $0x178] sm:$0xff]
        %v1309 = vld [vmem:[#allocation2 + $0x180] sm:$0xff]
        %v1310 = vld [vmem:[#allocation2 + $0x188] sm:$0xff]
        %v1311 = vld [vmem:[#allocation2 + $0x190] sm:$0xff]
        %v1312 = vld [vmem:[#allocation2 + $0x198] sm:$0xff]
        %v1313 = vld [vmem:[#allocation2 + $0x1a0] sm:$0xff]
        %v1314 = vld [vmem:[#allocation2 + $0x1a8] sm:$0xff]
        %v1315 = vld [vmem:[#allocation2 + $0x1b0] sm:$0xff]
        %v1316 = vld [vmem:[#allocation2 + $0x1b8] sm:$0xff]
        %v1317 = vld [vmem:[#allocation2 + $0x1c0] sm:$0xff]
        %v1318 = vld [vmem:[#allocation2 + $0x1c8] sm:$0xff]
        %v1319 = vld [vmem:[#allocation2 + $0x1d0] sm:$0xff]
        %v1320 = vld [vmem:[#allocation2 + $0x1d8] sm:$0xff]
        %v1321 = vld [vmem:[#allocation2 + $0x1e0] sm:$0xff]
        %v1322 = vld [vmem:[#allocation2 + $0x1e8] sm:$0xff]
        %v1323 = vld [vmem:[#allocation2 + $0x1f0] sm:$0xff]
        %v1324 = vld [vmem:[#allocation2 + $0x1f8] sm:$0xff]
        %v1325 = vld [vmem:[%s257] sm:$0x1]
        %v1327 = vlaneseq
        %v1328 = vshrl.u32 %v1327, 7
        %v1329 = vsub.s32 0, %v1328
        %v1330 = vrot.slane %v1325, %v1329
        %v1332 = vadd.f32 %v1261, %v1330
        %v1333 = vadd.f32 %v1262, %v1330
        %v1334 = vadd.f32 %v1263, %v1330
        %v1335 = vadd.f32 %v1264, %v1330
        %v1336 = vadd.f32 %v1265, %v1330
        %v1337 = vadd.f32 %v1266, %v1330
        %v1338 = vadd.f32 %v1267, %v1330
        %v1339 = vadd.f32 %v1268, %v1330
        %v1340 = vadd.f32 %v1269, %v1330
        %v1341 = vadd.f32 %v1270, %v1330
        %v1342 = vadd.f32 %v1271, %v1330
        %v1343 = vadd.f32 %v1272, %v1330
        %v1344 = vadd.f32 %v1273, %v1330
        %v1345 = vadd.f32 %v1274, %v1330
        %v1346 = vadd.f32 %v1275, %v1330
        %v1347 = vadd.f32 %v1276, %v1330
        %v1348 = vadd.f32 %v1277, %v1330
        %v1349 = vadd.f32 %v1278, %v1330
        %v1350 = vadd.f32 %v1279, %v1330
        %v1351 = vadd.f32 %v1280, %v1330
        %v1352 = vadd.f32 %v1281, %v1330
        %v1353 = vadd.f32 %v1282, %v1330
        %v1354 = vadd.f32 %v1283, %v1330
        %v1355 = vadd.f32 %v1284, %v1330
        %v1356 = vadd.f32 %v1285, %v1330
        %v1357 = vadd.f32 %v1286, %v1330
        %v1358 = vadd.f32 %v1287, %v1330
        %v1359 = vadd.f32 %v1288, %v1330
        %v1360 = vadd.f32 %v1289, %v1330
        %v1361 = vadd.f32 %v1290, %v1330
        %v1362 = vadd.f32 %v1291, %v1330
        %v1363 = vadd.f32 %v1292, %v1330
        %v1364 = vadd.f32 %v1293, %v1330
        %v1365 = vadd.f32 %v1294, %v1330
        %v1366 = vadd.f32 %v1295, %v1330
        %v1367 = vadd.f32 %v1296, %v1330
        %v1368 = vadd.f32 %v1297, %v1330
        %v1369 = vadd.f32 %v1298, %v1330
        %v1370 = vadd.f32 %v1299, %v1330
        %v1371 = vadd.f32 %v1300, %v1330
        %v1372 = vadd.f32 %v1301, %v1330
        %v1373 = vadd.f32 %v1302, %v1330
        %v1374 = vadd.f32 %v1303, %v1330
        %v1375 = vadd.f32 %v1304, %v1330
        %v1376 = vadd.f32 %v1305, %v1330
        %v1377 = vadd.f32 %v1306, %v1330
        %v1378 = vadd.f32 %v1307, %v1330
        %v1379 = vadd.f32 %v1308, %v1330
        %v1380 = vadd.f32 %v1309, %v1330
        %v1381 = vadd.f32 %v1310, %v1330
        %v1382 = vadd.f32 %v1311, %v1330
        %v1383 = vadd.f32 %v1312, %v1330
        %v1384 = vadd.f32 %v1313, %v1330
        %v1385 = vadd.f32 %v1314, %v1330
        %v1386 = vadd.f32 %v1315, %v1330
        %v1387 = vadd.f32 %v1316, %v1330
        %v1388 = vadd.f32 %v1317, %v1330
        %v1389 = vadd.f32 %v1318, %v1330
        %v1390 = vadd.f32 %v1319, %v1330
        %v1391 = vadd.f32 %v1320, %v1330
        %v1392 = vadd.f32 %v1321, %v1330
        %v1393 = vadd.f32 %v1322, %v1330
        %v1394 = vadd.f32 %v1323, %v1330
        %v1395 = vadd.f32 %v1324, %v1330
        %v1396 = vmax.f32 %v1332, 0.0
        %v1397 = vmax.f32 %v1333, 0.0
        %v1398 = vmax.f32 %v1334, 0.0
        %v1399 = vmax.f32 %v1335, 0.0
        %v1400 = vmax.f32 %v1336, 0.0
        %v1401 = vmax.f32 %v1337, 0.0
        %v1402 = vmax.f32 %v1338, 0.0
        %v1403 = vmax.f32 %v1339, 0.0
        %v1404 = vmax.f32 %v1340, 0.0
        %v1405 = vmax.f32 %v1341, 0.0
        %v1406 = vmax.f32 %v1342, 0.0
        %v1407 = vmax.f32 %v1343, 0.0
        %v1408 = vmax.f32 %v1344, 0.0
        %v1409 = vmax.f32 %v1345, 0.0
        %v1410 = vmax.f32 %v1346, 0.0
        %v1411 = vmax.f32 %v1347, 0.0
        %v1412 = vmax.f32 %v1348, 0.0
        %v1413 = vmax.f32 %v1349, 0.0
        %v1414 = vmax.f32 %v1350, 0.0
        %v1415 = vmax.f32 %v1351, 0.0
        %v1416 = vmax.f32 %v1352, 0.0
        %v1417 = vmax.f32 %v1353, 0.0
        %v1418 = vmax.f32 %v1354, 0.0
        %v1419 = vmax.f32 %v1355, 0.0
        %v1420 = vmax.f32 %v1356, 0.0
        %v1421 = vmax.f32 %v1357, 0.0
        %v1422 = vmax.f32 %v1358, 0.0
        %v1423 = vmax.f32 %v1359, 0.0
        %v1424 = vmax.f32 %v1360, 0.0
        %v1425 = vmax.f32 %v1361, 0.0
        %v1426 = vmax.f32 %v1362, 0.0
        %v1427 = vmax.f32 %v1363, 0.0
        %v1428 = vmax.f32 %v1364, 0.0
        %v1429 = vmax.f32 %v1365, 0.0
        %v1430 = vmax.f32 %v1366, 0.0
        %v1431 = vmax.f32 %v1367, 0.0
        %v1432 = vmax.f32 %v1368, 0.0
        %v1433 = vmax.f32 %v1369, 0.0
        %v1434 = vmax.f32 %v1370, 0.0
        %v1435 = vmax.f32 %v1371, 0.0
        %v1436 = vmax.f32 %v1372, 0.0
        %v1437 = vmax.f32 %v1373, 0.0
        %v1438 = vmax.f32 %v1374, 0.0
        %v1439 = vmax.f32 %v1375, 0.0
        %v1440 = vmax.f32 %v1376, 0.0
        %v1441 = vmax.f32 %v1377, 0.0
        %v1442 = vmax.f32 %v1378, 0.0
        %v1443 = vmax.f32 %v1379, 0.0
        %v1444 = vmax.f32 %v1380, 0.0
        %v1445 = vmax.f32 %v1381, 0.0
        %v1446 = vmax.f32 %v1382, 0.0
        %v1447 = vmax.f32 %v1383, 0.0
        %v1448 = vmax.f32 %v1384, 0.0
        %v1449 = vmax.f32 %v1385, 0.0
        %v1450 = vmax.f32 %v1386, 0.0
        %v1451 = vmax.f32 %v1387, 0.0
        %v1452 = vmax.f32 %v1388, 0.0
        %v1453 = vmax.f32 %v1389, 0.0
        %v1454 = vmax.f32 %v1390, 0.0
        %v1455 = vmax.f32 %v1391, 0.0
        %v1456 = vmax.f32 %v1392, 0.0
        %v1457 = vmax.f32 %v1393, 0.0
        %v1458 = vmax.f32 %v1394, 0.0
        %v1459 = vmax.f32 %v1395, 0.0
        %1460 = vst.msk [vmem:[%s265] sm:$0xff] %vm1193, %v1396
        %1461 = vst.msk [vmem:[%s265 + $0x8] sm:$0xff] %vm1193, %v1397
        %1462 = vst.msk [vmem:[%s265 + $0x10] sm:$0xff] %vm1193, %v1398
        %1463 = vst.msk [vmem:[%s265 + $0x18] sm:$0xff] %vm1193, %v1399
        %1464 = vst.msk [vmem:[%s265 + $0x20] sm:$0xff] %vm1193, %v1400
        %1465 = vst.msk [vmem:[%s265 + $0x28] sm:$0xff] %vm1193, %v1401
        %1466 = vst.msk [vmem:[%s265 + $0x30] sm:$0xff] %vm1193, %v1402
        %1467 = vst.msk [vmem:[%s265 + $0x38] sm:$0xff] %vm1193, %v1403
        %1468 = vst.msk [vmem:[%s265 + $0x40] sm:$0xff] %vm1193, %v1404
        %1469 = vst.msk [vmem:[%s265 + $0x48] sm:$0xff] %vm1193, %v1405
        %1470 = vst.msk [vmem:[%s265 + $0x50] sm:$0xff] %vm1193, %v1406
        %1471 = vst.msk [vmem:[%s265 + $0x58] sm:$0xff] %vm1193, %v1407
        %1472 = vst.msk [vmem:[%s265 + $0x60] sm:$0xff] %vm1193, %v1408
        %1473 = vst.msk [vmem:[%s265 + $0x68] sm:$0xff] %vm1193, %v1409
        %1474 = vst.msk [vmem:[%s265 + $0x70] sm:$0xff] %vm1193, %v1410
        %1475 = vst.msk [vmem:[%s265 + $0x78] sm:$0xff] %vm1193, %v1411
        %1476 = vst.msk [vmem:[%s265 + $0x80] sm:$0xff] %vm1193, %v1412
        %1477 = vst.msk [vmem:[%s265 + $0x88] sm:$0xff] %vm1193, %v1413
        %1478 = vst.msk [vmem:[%s265 + $0x90] sm:$0xff] %vm1193, %v1414
        %1479 = vst.msk [vmem:[%s265 + $0x98] sm:$0xff] %vm1193, %v1415
        %1480 = vst.msk [vmem:[%s265 + $0xa0] sm:$0xff] %vm1193, %v1416
        %1481 = vst.msk [vmem:[%s265 + $0xa8] sm:$0xff] %vm1193, %v1417
        %1482 = vst.msk [vmem:[%s265 + $0xb0] sm:$0xff] %vm1193, %v1418
        %1483 = vst.msk [vmem:[%s265 + $0xb8] sm:$0xff] %vm1193, %v1419
        %1484 = vst.msk [vmem:[%s265 + $0xc0] sm:$0xff] %vm1193, %v1420
        %1485 = vst.msk [vmem:[%s265 + $0xc8] sm:$0xff] %vm1193, %v1421
        %1486 = vst.msk [vmem:[%s265 + $0xd0] sm:$0xff] %vm1193, %v1422
        %1487 = vst.msk [vmem:[%s265 + $0xd8] sm:$0xff] %vm1193, %v1423
        %1488 = vst.msk [vmem:[%s265 + $0xe0] sm:$0xff] %vm1193, %v1424
        %1489 = vst.msk [vmem:[%s265 + $0xe8] sm:$0xff] %vm1193, %v1425
        %1490 = vst.msk [vmem:[%s265 + $0xf0] sm:$0xff] %vm1193, %v1426
        %1491 = vst.msk [vmem:[%s265 + $0xf8] sm:$0xff] %vm1193, %v1427
        %1492 = vst.msk [vmem:[%s265 + $0x100] sm:$0xff] %vm1193, %v1428
        %1493 = vst.msk [vmem:[%s265 + $0x108] sm:$0xff] %vm1193, %v1429
        %1494 = vst.msk [vmem:[%s265 + $0x110] sm:$0xff] %vm1193, %v1430
        %1495 = vst.msk [vmem:[%s265 + $0x118] sm:$0xff] %vm1193, %v1431
        %1496 = vst.msk [vmem:[%s265 + $0x120] sm:$0xff] %vm1193, %v1432
        %1497 = vst.msk [vmem:[%s265 + $0x128] sm:$0xff] %vm1193, %v1433
        %1498 = vst.msk [vmem:[%s265 + $0x130] sm:$0xff] %vm1193, %v1434
        %1499 = vst.msk [vmem:[%s265 + $0x138] sm:$0xff] %vm1193, %v1435
        %1500 = vst.msk [vmem:[%s265 + $0x140] sm:$0xff] %vm1193, %v1436
        %1501 = vst.msk [vmem:[%s265 + $0x148] sm:$0xff] %vm1193, %v1437
        %1502 = vst.msk [vmem:[%s265 + $0x150] sm:$0xff] %vm1193, %v1438
        %1503 = vst.msk [vmem:[%s265 + $0x158] sm:$0xff] %vm1193, %v1439
        %1504 = vst.msk [vmem:[%s265 + $0x160] sm:$0xff] %vm1193, %v1440
        %1505 = vst.msk [vmem:[%s265 + $0x168] sm:$0xff] %vm1193, %v1441
        %1506 = vst.msk [vmem:[%s265 + $0x170] sm:$0xff] %vm1193, %v1442
        %1507 = vst.msk [vmem:[%s265 + $0x178] sm:$0xff] %vm1193, %v1443
        %1508 = vst.msk [vmem:[%s265 + $0x180] sm:$0xff] %vm1193, %v1444
        %1509 = vst.msk [vmem:[%s265 + $0x188] sm:$0xff] %vm1193, %v1445
        %1510 = vst.msk [vmem:[%s265 + $0x190] sm:$0xff] %vm1193, %v1446
        %1511 = vst.msk [vmem:[%s265 + $0x198] sm:$0xff] %vm1193, %v1447
        %1512 = vst.msk [vmem:[%s265 + $0x1a0] sm:$0xff] %vm1193, %v1448
        %1513 = vst.msk [vmem:[%s265 + $0x1a8] sm:$0xff] %vm1193, %v1449
        %1514 = vst.msk [vmem:[%s265 + $0x1b0] sm:$0xff] %vm1193, %v1450
        %1515 = vst.msk [vmem:[%s265 + $0x1b8] sm:$0xff] %vm1193, %v1451
        %1516 = vst.msk [vmem:[%s265 + $0x1c0] sm:$0xff] %vm1193, %v1452
        %1517 = vst.msk [vmem:[%s265 + $0x1c8] sm:$0xff] %vm1193, %v1453
        %1518 = vst.msk [vmem:[%s265 + $0x1d0] sm:$0xff] %vm1193, %v1454
        %1519 = vst.msk [vmem:[%s265 + $0x1d8] sm:$0xff] %vm1193, %v1455
        %1520 = vst.msk [vmem:[%s265 + $0x1e0] sm:$0xff] %vm1193, %v1456
        %1521 = vst.msk [vmem:[%s265 + $0x1e8] sm:$0xff] %vm1193, %v1457
        %1522 = vst.msk [vmem:[%s265 + $0x1f0] sm:$0xff] %vm1193, %v1458
        %1523 = vst.msk [vmem:[%s265 + $0x1f8] sm:$0xff] %vm1193, %v1459
      $region40: #{tpu_custom_call.1} parent=31 // pred_fallthru
        _
      %s1524 = smul.u32 64, %s19
      %p1525 = scmp.lt.s32.totalorder %s1524, 255
      %s1526 = scalar_select %p1525, %s1524, 255
      %p1527 = scmp.lt.s32.totalorder %s20, 0
      %s1528 = scalar_select %p1527, %s20, 0
      %s1529 = sadd.s32 %s1528, %s1526
      %s1530 = smul.addr %s1529, 8
      %s1531 = scalar_lea.vmem %s3, %s1530
      // Predicated region
      $region41: #{tpu_custom_call.1} parent=31 // pred_check
        %p1532 = pneg %p135
      $region42: #{tpu_custom_call.1} parent=31 // pred_check_branch
        %1534 = sbr.rel (%p1532) target = $region44
      $region43: #{tpu_custom_call.1} parent=31 // pred_region
        %s1535 = smul.u32 64, %s19
      $region44: #{tpu_custom_call.1} parent=31 // pred_fallthru
        _
    $region32: #{tpu_custom_call.1} parent=5 // pred_fallthru
      _
    %p1536 = scmp.le.s32.totalorder 2, %s9
    // Predicated region
    $region45: #{tpu_custom_call.1} parent=5 // pred_check
      %p1537 = pneg %p1536
    $region46: #{tpu_custom_call.1} parent=5 // pred_check_branch
      %1539 = sbr.rel (%p1537) target = $region48
    $region47: #{tpu_custom_call.1} parent=5 // pred_region
      %s1540 = ssub.s32 %s9, 2
      // Predicated region
      $region49: #{tpu_custom_call.1} parent=47 // pred_check
        %p1541 = pneg %p141
      $region50: #{tpu_custom_call.1} parent=47 // pred_check_branch
        %1543 = sbr.rel (%p1541) target = $region52
      $region51: #{tpu_custom_call.1} parent=47 // pred_region
        %s1544 = smul.u32 64, %s22
        %p1545 = scmp.lt.s32.totalorder %s1544, 255
        %s1546 = scalar_select %p1545, %s1544, 255
        %p1547 = scmp.lt.s32.totalorder %s23, 0
        %s1548 = scalar_select %p1547, %s23, 0
        %s1549 = sadd.s32 %s1548, %s1546
        %s1550 = smul.addr %s1549, 8
        %s1551 = scalar_lea.vmem %s3, %s1550
      $region52: #{tpu_custom_call.1} parent=47 // pred_fallthru
        _
    $region48: #{tpu_custom_call.1} parent=5 // pred_fallthru
      _
  $region6: #{tpu_custom_call.1} parent=0 // loop_footer
    %s13 = sadd.s32 1, %s9
  $region7: #{tpu_custom_call.1} parent=0 // loop_footer_branch
    %8 = sbr.rel target = $region3
  $region8: #{tpu_custom_call.1} parent=0 // loop_exit
    _

</llo_original>
